<compile_context>
chip_gen: v5e
topology: v5e:2x2
jax: 0.10.0
libtpu: 0.0.40
codegen_flags: <defaults>
</compile_context>

<pallas_src>
import functools

import jax
import jax.numpy as jnp
from jax import lax
from jax.experimental import pallas as pl
from jax.experimental.pallas import tpu as pltpu

IN_DIM = 28 * 28     # 784
H1 = 512             # fc1 out (already a multiple of 128)
H2_PAD = 128         # fc2 out (64) zero-padded to the 128-lane vreg width
C_PAD = 128          # num_classes (10) zero-padded to the 128-lane vreg width
B_PACKED = H1 + H2_PAD + C_PAD   # 768 packed bias lanes

_NEG = -1e30  # mask value for padded logit columns (exp underflows to 0)


def mlp_kernel(x_ref, w1_ref, w2_ref, w3_ref, b_ref, o_ref, *, num_classes):
    # x: (B_TILE, 784) f32   w1: (784, 512) bf16   w2: (512, 128) bf16
    # w3: (128, 128) bf16    b: (1, 768) f32 = [b1 | b2_pad | b3_pad]
    x = x_ref[...]
    b1 = b_ref[:, 0:H1]
    b2 = b_ref[:, H1:H1 + H2_PAD]
    b3 = b_ref[:, H1 + H2_PAD:B_PACKED]

    # fc1 + ReLU (bf16 MXU operands, f32 accumulation / elementwise)
    h1 = jnp.dot(x.astype(jnp.bfloat16), w1_ref[...],
                 preferred_element_type=jnp.float32)
    h1 = jnp.maximum(h1 + b1, 0.0)

    # dropout (eval mode) -> identity

    # fc2 + ReLU
    h2 = jnp.dot(h1.astype(jnp.bfloat16), w2_ref[...],
                 preferred_element_type=jnp.float32)
    h2 = jnp.maximum(h2 + b2, 0.0)

    # dropout (eval mode) -> identity

    # fc3 (padded to 128 classes)
    logits = jnp.dot(h2.astype(jnp.bfloat16), w3_ref[...],
                     preferred_element_type=jnp.float32) + b3

    # Mask padded class columns so softmax normalizes over the real classes.
    col = lax.broadcasted_iota(jnp.int32, logits.shape, 1)
    logits = jnp.where(col < num_classes, logits, _NEG)

    # Numerically stable softmax along dim=1 (classes).
    m = jnp.max(logits, axis=1, keepdims=True)
    e = jnp.exp(logits - m)
    denom = jnp.sum(e, axis=1, keepdims=True)
    o_ref[...] = (e * pl.reciprocal(denom, approx=True)).astype(o_ref.dtype)


def prepare_params(raw_params):
    """Pad/cast f32 (in,out)-layout params into the kernel's layout.

    Returns (w1_bf16, w2_pad_bf16, w3_pad_bf16, packed_bias_f32)."""
    w1, b1, w2, b2, w3, b3 = raw_params
    w2p = jnp.zeros((H1, H2_PAD), jnp.float32).at[:, :w2.shape[1]].set(w2)
    w3p = jnp.zeros((H2_PAD, C_PAD), jnp.float32).at[:w3.shape[0], :w3.shape[1]].set(w3)
    b2p = jnp.zeros((1, H2_PAD), jnp.float32).at[:, :b2.shape[1]].set(b2)
    b3p = jnp.zeros((1, C_PAD), jnp.float32).at[:, :b3.shape[1]].set(b3)
    b_packed = jnp.concatenate([b1, b2p, b3p], axis=1)   # (1, 768) f32
    return (w1.astype(jnp.bfloat16),
            w2p.astype(jnp.bfloat16),
            w3p.astype(jnp.bfloat16),
            b_packed)


def fully_connected_forward(x_nchw, kernel_params, *, num_classes=10,
                            max_batch_tile=256):
    """x_nchw: (B, 1, 28, 28) f32. Returns (B, num_classes) softmax probs."""
    w1, w2p, w3p, b_packed = kernel_params
    B = x_nchw.shape[0]
    x_flat = x_nchw.reshape(B, -1).astype(jnp.float32)   # matches x.view(B, -1)

    # Batch tiling: sublane-align (multiple of 8), cap the tile, pad the batch.
    b_align = -(-B // 8) * 8
    b_tile = min(max_batch_tile, b_align)
    b_pad = -(-b_align // b_tile) * b_tile
    if b_pad != B:
        x_flat = jnp.pad(x_flat, ((0, b_pad - B), (0, 0)))

    grid = (b_pad // b_tile,)

    cost = pl.CostEstimate(
        flops=2 * b_pad * (IN_DIM * H1 + H1 * H2_PAD + H2_PAD * C_PAD),
        transcendentals=b_pad * C_PAD,
        bytes_accessed=(x_flat.size * 4 + w1.size * 2 + w2p.size * 2
                        + w3p.size * 2 + b_packed.size * 4 + b_pad * C_PAD * 4),
    )

    out_pad = pl.pallas_call(
        functools.partial(mlp_kernel, num_classes=num_classes),
        out_shape=jax.ShapeDtypeStruct((b_pad, C_PAD), jnp.float32),
        grid=grid,
        in_specs=[
            pl.BlockSpec((b_tile, IN_DIM), lambda i: (i, 0)),     # x: per-tile
            pl.BlockSpec((IN_DIM, H1), lambda i: (0, 0)),         # w1: resident
            pl.BlockSpec((H1, H2_PAD), lambda i: (0, 0)),         # w2: resident
            pl.BlockSpec((H2_PAD, C_PAD), lambda i: (0, 0)),      # w3: resident
            pl.BlockSpec((1, B_PACKED), lambda i: (0, 0)),        # packed biases
        ],
        out_specs=pl.BlockSpec((b_tile, C_PAD), lambda i: (i, 0)),
        compiler_params=pltpu.CompilerParams(
            dimension_semantics=("parallel",),
        ),
        cost_estimate=cost,
    )(x_flat, w1, w2p, w3p, b_packed)

    return out_pad[:B, :num_classes]


def init_params(key, num_classes=10):
    """nn.Linear-style init (uniform +/- 1/sqrt(fan_in)); weights as (in, out)."""
    def linear(k, fan_in, fan_out):
        kw, kb = jax.random.split(k)
        bound = 1.0 / jnp.sqrt(fan_in)
        w = jax.random.uniform(kw, (fan_in, fan_out), jnp.float32, -bound, bound)
        b = jax.random.uniform(kb, (1, fan_out), jnp.float32, -bound, bound)
        return w, b

    k1, k2, k3 = jax.random.split(key, 3)
    w1, b1 = linear(k1, IN_DIM, 512)
    w2, b2 = linear(k2, 512, 64)
    w3, b3 = linear(k3, 64, num_classes)
    return (w1, b1, w2, b2, w3, b3)


def reference_forward(x_nchw, raw_params, num_classes=10):
    """Pure-JAX reference mirroring the kernel's bf16 dot operands."""
    w1, b1, w2, b2, w3, b3 = raw_params
    x = x_nchw.reshape(x_nchw.shape[0], -1).astype(jnp.float32)
    h1 = jnp.maximum(
        jnp.dot(x.astype(jnp.bfloat16), w1.astype(jnp.bfloat16),
                preferred_element_type=jnp.float32) + b1, 0.0)
    h2 = jnp.maximum(
        jnp.dot(h1.astype(jnp.bfloat16), w2.astype(jnp.bfloat16),
                preferred_element_type=jnp.float32) + b2, 0.0)
    logits = jnp.dot(h2.astype(jnp.bfloat16), w3.astype(jnp.bfloat16),
                     preferred_element_type=jnp.float32) + b3
    return jax.nn.softmax(logits, axis=1)


if __name__ == "__main__":
    key = jax.random.PRNGKey(0)
    k_params, k_x = jax.random.split(key)

    num_classes = 10
    raw_params = init_params(k_params, num_classes=num_classes)
    kernel_params = prepare_params(raw_params)

    # Small MNIST-like batch: (B, C, H, W) = (2, 1, 28, 28)
    x = jax.random.normal(k_x, (2, 1, 28, 28), dtype=jnp.float32)

    out = fully_connected_forward(x, kernel_params, num_classes=num_classes)
    out = jax.block_until_ready(out)

    # Sanity checks: shape, softmax normalization, and match vs. JAX reference.
    assert out.shape == (2, num_classes), out.shape
    row_sums = jnp.sum(out, axis=1)
    assert bool(jnp.all(jnp.abs(row_sums - 1.0) < 1e-2)), row_sums

    ref = reference_forward(x, raw_params, num_classes=num_classes)
    assert bool(jnp.all(jnp.abs(out - ref) < 1e-2)), jnp.max(jnp.abs(out - ref))

    print("KERNEL_OK")
</pallas_src>

<mosaic_0001>
module attributes {stable_mosaic.version = 11 : i64} {
  func.func @mlp_kernel(%arg0: i32, %arg1: memref<8x784xf32, #tpu.memory_space<vmem>>, %arg2: memref<784x512xbf16, #tpu.memory_space<vmem>>, %arg3: memref<512x128xbf16, #tpu.memory_space<vmem>>, %arg4: memref<128x128xbf16, #tpu.memory_space<vmem>>, %arg5: memref<1x768xf32, #tpu.memory_space<vmem>>, %arg6: memref<8x128xf32, #tpu.memory_space<vmem>>) attributes {dimension_semantics = [#tpu.dimension_semantics<parallel>], iteration_bounds = array<i64: 1>, scalar_prefetch = 0 : i64, scratch_operands = 0 : i64, tpu.core_type = #tpu.core_type<tc>, window_params = [{transform_indices = @transform_0, window_bounds = array<i64: 8, 784>}, {pipeline_mode = #tpu.pipeline_mode<synchronous>, transform_indices = @transform_1, window_bounds = array<i64: 784, 512>}, {pipeline_mode = #tpu.pipeline_mode<synchronous>, transform_indices = @transform_2, window_bounds = array<i64: 512, 128>}, {pipeline_mode = #tpu.pipeline_mode<synchronous>, transform_indices = @transform_3, window_bounds = array<i64: 128, 128>}, {pipeline_mode = #tpu.pipeline_mode<synchronous>, transform_indices = @transform_4, window_bounds = array<i64: 1, 768>}, {transform_indices = @transform_5, window_bounds = array<i64: 8, 128>}]} {
    %c0 = arith.constant 0 : index
    %c0_0 = arith.constant 0 : index
    %0 = vector.load %arg1[%c0, %c0_0] : memref<8x784xf32, #tpu.memory_space<vmem>>, vector<8x784xf32>
    %c0_1 = arith.constant 0 : index
    %c0_2 = arith.constant 0 : index
    %1 = vector.load %arg5[%c0_1, %c0_2] : memref<1x768xf32, #tpu.memory_space<vmem>>, vector<1x512xf32>
    %c0_3 = arith.constant 0 : index
    %c512 = arith.constant 512 : index
    %2 = vector.load %arg5[%c0_3, %c512] : memref<1x768xf32, #tpu.memory_space<vmem>>, vector<1x128xf32>
    %c0_4 = arith.constant 0 : index
    %c640 = arith.constant 640 : index
    %3 = vector.load %arg5[%c0_4, %c640] : memref<1x768xf32, #tpu.memory_space<vmem>>, vector<1x128xf32>
    %4 = arith.truncf %0 : vector<8x784xf32> to vector<8x784xbf16>
    %c0_5 = arith.constant 0 : index
    %c0_6 = arith.constant 0 : index
    %5 = vector.load %arg2[%c0_5, %c0_6] : memref<784x512xbf16, #tpu.memory_space<vmem>>, vector<784x512xbf16>
    %cst = arith.constant dense<0.000000e+00> : vector<8x512xf32>
    %6 = tpu.matmul %4, %5, %cst {dimension_numbers = #tpu.dot_dimension_numbers<[1], [0], [0], [1], [0, 0, 1, 1], [], []>} : vector<8x784xbf16>, vector<784x512xbf16>, vector<8x512xf32> -> vector<8x512xf32>
    %7 = vector.broadcast %1 : vector<1x512xf32> to vector<8x512xf32>
    %8 = arith.addf %6, %7 : vector<8x512xf32>
    %cst_7 = arith.constant 0.000000e+00 : f32
    %9 = vector.broadcast %cst_7 : f32 to vector<8x512xf32>
    %10 = arith.maximumf %8, %9 : vector<8x512xf32>
    %11 = arith.truncf %10 : vector<8x512xf32> to vector<8x512xbf16>
    %c0_8 = arith.constant 0 : index
    %c0_9 = arith.constant 0 : index
    %12 = vector.load %arg3[%c0_8, %c0_9] : memref<512x128xbf16, #tpu.memory_space<vmem>>, vector<512x128xbf16>
    %cst_10 = arith.constant dense<0.000000e+00> : vector<8x128xf32>
    %13 = tpu.matmul %11, %12, %cst_10 {dimension_numbers = #tpu.dot_dimension_numbers<[1], [0], [0], [1], [0, 0, 1, 1], [], []>} : vector<8x512xbf16>, vector<512x128xbf16>, vector<8x128xf32> -> vector<8x128xf32>
    %14 = vector.broadcast %2 : vector<1x128xf32> to vector<8x128xf32>
    %15 = arith.addf %13, %14 : vector<8x128xf32>
    %cst_11 = arith.constant 0.000000e+00 : f32
    %16 = vector.broadcast %cst_11 : f32 to vector<8x128xf32>
    %17 = arith.maximumf %15, %16 : vector<8x128xf32>
    %18 = arith.truncf %17 : vector<8x128xf32> to vector<8x128xbf16>
    %c0_12 = arith.constant 0 : index
    %c0_13 = arith.constant 0 : index
    %19 = vector.load %arg4[%c0_12, %c0_13] : memref<128x128xbf16, #tpu.memory_space<vmem>>, vector<128x128xbf16>
    %cst_14 = arith.constant dense<0.000000e+00> : vector<8x128xf32>
    %20 = tpu.matmul %18, %19, %cst_14 {dimension_numbers = #tpu.dot_dimension_numbers<[1], [0], [0], [1], [0, 0, 1, 1], [], []>} : vector<8x128xbf16>, vector<128x128xbf16>, vector<8x128xf32> -> vector<8x128xf32>
    %21 = vector.broadcast %3 : vector<1x128xf32> to vector<8x128xf32>
    %22 = arith.addf %20, %21 : vector<8x128xf32>
    %23 = tpu.iota {dimensions = array<i32: 1>} : vector<8x128xi32>
    %c10_i32 = arith.constant 10 : i32
    %24 = vector.broadcast %c10_i32 : i32 to vector<8x128xi32>
    %25 = arith.cmpi slt, %23, %24 : vector<8x128xi32>
    %cst_15 = arith.constant -1.000000e+30 : f32
    %26 = vector.broadcast %cst_15 : f32 to vector<8x128xf32>
    %27 = arith.select %25, %22, %26 : vector<8x128xi1>, vector<8x128xf32>
    %cst_16 = arith.constant dense<0xFF800000> : vector<8xf32>
    %28 = vector.multi_reduction <maximumf>, %27, %cst_16 [1] : vector<8x128xf32> to vector<8xf32>
    %29 = vector.shape_cast %28 : vector<8xf32> to vector<8x1xf32>
    %30 = vector.broadcast %29 : vector<8x1xf32> to vector<8x128xf32>
    %31 = arith.subf %27, %30 : vector<8x128xf32>
    %32 = math.exp %31 : vector<8x128xf32>
    %cst_17 = arith.constant dense<0.000000e+00> : vector<8xf32>
    %33 = vector.multi_reduction <add>, %32, %cst_17 [1] : vector<8x128xf32> to vector<8xf32>
    %34 = vector.shape_cast %33 : vector<8xf32> to vector<8x1xf32>
    %35 = tpu.reciprocal %34 {approx = true} : vector<8x1xf32> -> vector<8x1xf32>
    %36 = vector.broadcast %35 : vector<8x1xf32> to vector<8x128xf32>
    %37 = arith.mulf %32, %36 : vector<8x128xf32>
    %c0_18 = arith.constant 0 : index
    %c0_19 = arith.constant 0 : index
    %38 = vector.load %arg6[%c0_18, %c0_19] : memref<8x128xf32, #tpu.memory_space<vmem>>, vector<8x128xf32>
    tpu.vector_store %arg6[%c0_18, %c0_19], %37 {strides = array<i32>} : memref<8x128xf32, #tpu.memory_space<vmem>>, vector<8x128xf32>,
    return
  }
  func.func @transform_0(%arg0: i32) -> (i32, i32) {
    %c0_i32 = arith.constant 0 : i32
    %c0_i32_0 = arith.constant 0 : i32
    return %arg0, %c0_i32 : i32, i32
  }
  func.func @transform_1(%arg0: i32) -> (i32, i32) {
    %c0_i32 = arith.constant 0 : i32
    %c0_i32_0 = arith.constant 0 : i32
    %c0_i32_1 = arith.constant 0 : i32
    return %c0_i32, %c0_i32_0 : i32, i32
  }
  func.func @transform_2(%arg0: i32) -> (i32, i32) {
    %c0_i32 = arith.constant 0 : i32
    %c0_i32_0 = arith.constant 0 : i32
    %c0_i32_1 = arith.constant 0 : i32
    return %c0_i32, %c0_i32_0 : i32, i32
  }
  func.func @transform_3(%arg0: i32) -> (i32, i32) {
    %c0_i32 = arith.constant 0 : i32
    %c0_i32_0 = arith.constant 0 : i32
    %c0_i32_1 = arith.constant 0 : i32
    return %c0_i32, %c0_i32_0 : i32, i32
  }
  func.func @transform_4(%arg0: i32) -> (i32, i32) {
    %c0_i32 = arith.constant 0 : i32
    %c0_i32_0 = arith.constant 0 : i32
    %c0_i32_1 = arith.constant 0 : i32
    return %c0_i32, %c0_i32_0 : i32, i32
  }
  func.func @transform_5(%arg0: i32) -> (i32, i32) {
    %c0_i32 = arith.constant 0 : i32
    %c0_i32_0 = arith.constant 0 : i32
    return %arg0, %c0_i32 : i32, i32
  }
}

</mosaic_0001>

<llo_original>
// kernel: tpu_custom_call.1
$region0: #{tpu_custom_call.1}
  #allocation0 [shape = 'u32[]', space=smem, size = 0x4, offset = 0x4, fixed_abs, tag = 'smem constant byte address 0x4 - core index']
  #allocation1 [shape = 'u32[72,128]{1,0:T(1,128)}', space=vmem, size = 0x9000, scoped, tag = 'internal scratch']
  %s0 = inlined_call_operand.hbm [shape: f32[8,784], index: 0, kind: input, shape index: {}]
  %s1 = inlined_call_operand.hbm [shape: bf16[784,512], index: 1, kind: input, shape index: {}]
  %s2 = inlined_call_operand.hbm [shape: bf16[512,128], index: 2, kind: input, shape index: {}]
  %s3 = inlined_call_operand.hbm [shape: bf16[128,128], index: 3, kind: input, shape index: {}]
  %s4 = inlined_call_operand.hbm [shape: f32[1,768], index: 4, kind: input, shape index: {}]
  %s5 = inlined_call_operand.hbm [shape: f32[8,128], index: 5, kind: output, shape index: {}]
  %s6 = sld [smem:[#allocation0]]
  $region50: #{tpu_custom_call.1} parent=0
    _
  %s8 = ssub.s32 1, %s6
  %s9 = scalar_select 0, %s8, %s6
  $region1: #{tpu_custom_call.1} parent=0
    #allocation2 [shape = 'u8[28672]{0}', space=vmem, size = 0x7000, scoped, tag = 'input window, operand 0, single buffered']
    #allocation3 [shape = 's32[1]{0}', space=sflag, size = 0x4, scoped, tag = 'scoped memory for tpu_custom_call.1']
    #allocation4 [shape = 's32[1]{0}', space=sflag, size = 0x4, scoped, tag = 'scoped memory for tpu_custom_call.1']
    #allocation5 [shape = 'u8[802816]{0}', space=vmem, size = 0xc4000, scoped, tag = 'input window, operand 1, single buffered']
    #allocation6 [shape = 's32[1]{0}', space=sflag, size = 0x4, scoped, tag = 'scoped memory for tpu_custom_call.1']
    #allocation7 [shape = 'u8[131072]{0}', space=vmem, size = 0x20000, scoped, tag = 'input window, operand 2, single buffered']
    #allocation8 [shape = 'u8[32768]{0}', space=vmem, size = 0x8000, scoped, tag = 'input window, operand 3, single buffered']
    #allocation9 [shape = 's32[1]{0}', space=sflag, size = 0x4, scoped, tag = 'scoped memory for tpu_custom_call.1']
    #allocation10 [shape = 'u8[3072]{0}', space=vmem, size = 0xc00, scoped, tag = 'input window, operand 4, single buffered']
    #allocation11 [shape = 'u8[4096]{0}', space=vmem, size = 0x1000, scoped, tag = 'output window, operand 0, single buffered']
    %10 = vsyncpa [#allocation3], 0
    %11 = vsyncpa [#allocation6], 0
    %12 = vsyncpa [#allocation9], 0
    %13 = vsyncpa [#allocation4], 0
    // Predicated region
    $region2: #{tpu_custom_call.1} parent=1 // pred_check
      _
    $region3: #{tpu_custom_call.1} parent=1 // pred_check_branch
      %15 = sbr.rel (0) target = $region5
    $region4: #{tpu_custom_call.1} parent=1 // pred_region
      %17 = vsyncadd [#allocation3], 0
      %s19 = sshll.u32 %s0, 4
      %s20 = int_to_ptr.hbm [resolvable:$true] %s19
      %s21 = sshll.u32 [#allocation2], 4
      %s22 = int_to_ptr.vmem [resolvable:$true] %s21
      %24 = dma.hbm_to_vmem [thread:$0]  %s20, 896, %s22, [#allocation3]
    $region5: #{tpu_custom_call.1} parent=1 // pred_fallthru
      _
    // Predicated region
    $region6: #{tpu_custom_call.1} parent=1 // pred_check
      _
    $region7: #{tpu_custom_call.1} parent=1 // pred_check_branch
      %26 = sbr.rel (0) target = $region9
    $region8: #{tpu_custom_call.1} parent=1 // pred_region
      %28 = vsyncadd [#allocation6], 0
      %s29 = sshll.u32 %s1, 4
      %s30 = int_to_ptr.hbm [resolvable:$true] %s29
      %s31 = sshll.u32 [#allocation5], 4
      %s32 = int_to_ptr.vmem [resolvable:$true] %s31
      %37 = dma.hbm_to_vmem [thread:$0]  %s30, 25088, %s32, [#allocation6], 256, 256, 16
    $region9: #{tpu_custom_call.1} parent=1 // pred_fallthru
      _
    // Predicated region
    $region10: #{tpu_custom_call.1} parent=1 // pred_check
      _
    $region11: #{tpu_custom_call.1} parent=1 // pred_check_branch
      %39 = sbr.rel (0) target = $region13
    $region12: #{tpu_custom_call.1} parent=1 // pred_region
      %41 = vsyncadd [#allocation6], 0
      %s42 = sshll.u32 %s2, 4
      %s43 = int_to_ptr.hbm [resolvable:$true] %s42
      %s44 = sshll.u32 [#allocation7], 4
      %s45 = int_to_ptr.vmem [resolvable:$true] %s44
      %50 = dma.hbm_to_vmem [thread:$0]  %s43, 4096, %s45, [#allocation6], 64, 64, 4
    $region13: #{tpu_custom_call.1} parent=1 // pred_fallthru
      _
    // Predicated region
    $region14: #{tpu_custom_call.1} parent=1 // pred_check
      _
    $region15: #{tpu_custom_call.1} parent=1 // pred_check_branch
      %52 = sbr.rel (0) target = $region17
    $region16: #{tpu_custom_call.1} parent=1 // pred_region
      %54 = vsyncadd [#allocation9], 0
      %s55 = sshll.u32 %s3, 4
      %s56 = int_to_ptr.hbm [resolvable:$true] %s55
      %s57 = sshll.u32 [#allocation8], 4
      %s58 = int_to_ptr.vmem [resolvable:$true] %s57
      %63 = dma.hbm_to_vmem [thread:$0]  %s56, 1024, %s58, [#allocation9], 64, 64, 4
    $region17: #{tpu_custom_call.1} parent=1 // pred_fallthru
      _
    // Predicated region
    $region18: #{tpu_custom_call.1} parent=1 // pred_check
      _
    $region19: #{tpu_custom_call.1} parent=1 // pred_check_branch
      %65 = sbr.rel (0) target = $region21
    $region20: #{tpu_custom_call.1} parent=1 // pred_region
      %67 = vsyncadd [#allocation9], 0
      %s69 = sshll.u32 %s4, 4
      %s70 = int_to_ptr.hbm [resolvable:$true] %s69
      %s71 = sshll.u32 [#allocation10], 4
      %s72 = int_to_ptr.vmem [resolvable:$true] %s71
      %74 = dma.hbm_to_vmem [thread:$0]  %s70, 96, %s72, [#allocation9]
    $region21: #{tpu_custom_call.1} parent=1 // pred_fallthru
      _
    // Predicated region
    $region22: #{tpu_custom_call.1} parent=1 // pred_check
      _
    $region23: #{tpu_custom_call.1} parent=1 // pred_check_branch
      %76 = sbr.rel (0) target = $region25
    $region24: #{tpu_custom_call.1} parent=1 // pred_region
      %78 = dma.done [#allocation3], 896
    $region25: #{tpu_custom_call.1} parent=1 // pred_fallthru
      _
    // Predicated region
    $region26: #{tpu_custom_call.1} parent=1 // pred_check
      _
    $region27: #{tpu_custom_call.1} parent=1 // pred_check_branch
      %80 = sbr.rel (0) target = $region29
    $region28: #{tpu_custom_call.1} parent=1 // pred_region
      %82 = dma.done [#allocation6], 25088
    $region29: #{tpu_custom_call.1} parent=1 // pred_fallthru
      _
    // Predicated region
    $region30: #{tpu_custom_call.1} parent=1 // pred_check
      _
    $region31: #{tpu_custom_call.1} parent=1 // pred_check_branch
      %84 = sbr.rel (0) target = $region33
    $region32: #{tpu_custom_call.1} parent=1 // pred_region
      %86 = dma.done [#allocation6], 4096
    $region33: #{tpu_custom_call.1} parent=1 // pred_fallthru
      _
    // Predicated region
    $region34: #{tpu_custom_call.1} parent=1 // pred_check
      _
    $region35: #{tpu_custom_call.1} parent=1 // pred_check_branch
      %88 = sbr.rel (0) target = $region37
    $region36: #{tpu_custom_call.1} parent=1 // pred_region
      %90 = dma.done [#allocation9], 1024
    $region37: #{tpu_custom_call.1} parent=1 // pred_fallthru
      _
    // Predicated region
    $region38: #{tpu_custom_call.1} parent=1 // pred_check
      _
    $region39: #{tpu_custom_call.1} parent=1 // pred_check_branch
      %92 = sbr.rel (0) target = $region41
    $region40: #{tpu_custom_call.1} parent=1 // pred_region
      %94 = dma.done [#allocation9], 96
    $region41: #{tpu_custom_call.1} parent=1 // pred_fallthru
      _
    %v96 = vld [vmem:[#allocation2] sm:$0xff]
    %v97 = vld [vmem:[#allocation2 + $0x8] sm:$0xff]
    %v98 = vld [vmem:[#allocation2 + $0x10] sm:$0xff]
    %v99 = vld [vmem:[#allocation2 + $0x18] sm:$0xff]
    %v100 = vld [vmem:[#allocation2 + $0x20] sm:$0xff]
    %v101 = vld [vmem:[#allocation2 + $0x28] sm:$0xff]
    %v102 = vld [vmem:[#allocation2 + $0x30] sm:$0xff]
    %v103 = vld [vmem:[#allocation10] sm:$0xf]
    %v104 = vld [vmem:[#allocation10 + $0x4] sm:$0x1]
    %v105 = vld [vmem:[#allocation10 + $0x5] sm:$0x1]
    %v106 = vpack.c.bf16 %v96, %v96
    %v107 = vpack.c.bf16 %v97, %v97
    %v108 = vpack.c.bf16 %v98, %v98
    %v109 = vpack.c.bf16 %v99, %v99
    %v110 = vpack.c.bf16 %v100, %v100
    %v111 = vpack.c.bf16 %v101, %v101
    %v112 = vpack.c.bf16 %v102, %v102
    %v113 = vld [vmem:[#allocation5] sm:$0xff]
    %v114 = vld [vmem:[#allocation5 + $0x8] sm:$0xff]
    %v115 = vld [vmem:[#allocation5 + $0x10] sm:$0xff]
    %v116 = vld [vmem:[#allocation5 + $0x18] sm:$0xff]
    %v117 = vld [vmem:[#allocation5 + $0x20] sm:$0xff]
    %v118 = vld [vmem:[#allocation5 + $0x28] sm:$0xff]
    %v119 = vld [vmem:[#allocation5 + $0x30] sm:$0xff]
    %v120 = vld [vmem:[#allocation5 + $0x38] sm:$0xff]
    %v121 = vld [vmem:[#allocation5 + $0x40] sm:$0xff]
    %v122 = vld [vmem:[#allocation5 + $0x48] sm:$0xff]
    %v123 = vld [vmem:[#allocation5 + $0x50] sm:$0xff]
    %v124 = vld [vmem:[#allocation5 + $0x58] sm:$0xff]
    %v125 = vld [vmem:[#allocation5 + $0x60] sm:$0xff]
    %v126 = vld [vmem:[#allocation5 + $0x68] sm:$0xff]
    %v127 = vld [vmem:[#allocation5 + $0x70] sm:$0xff]
    %v128 = vld [vmem:[#allocation5 + $0x78] sm:$0xff]
    %v129 = vld [vmem:[#allocation5 + $0x80] sm:$0xff]
    %v130 = vld [vmem:[#allocation5 + $0x88] sm:$0xff]
    %v131 = vld [vmem:[#allocation5 + $0x90] sm:$0xff]
    %v132 = vld [vmem:[#allocation5 + $0x98] sm:$0xff]
    %v133 = vld [vmem:[#allocation5 + $0xa0] sm:$0xff]
    %v134 = vld [vmem:[#allocation5 + $0xa8] sm:$0xff]
    %v135 = vld [vmem:[#allocation5 + $0xb0] sm:$0xff]
    %v136 = vld [vmem:[#allocation5 + $0xb8] sm:$0xff]
    %v137 = vld [vmem:[#allocation5 + $0xc0] sm:$0xff]
    %v138 = vld [vmem:[#allocation5 + $0xc8] sm:$0xff]
    %v139 = vld [vmem:[#allocation5 + $0xd0] sm:$0xff]
    %v140 = vld [vmem:[#allocation5 + $0xd8] sm:$0xff]
    %v141 = vld [vmem:[#allocation5 + $0xe0] sm:$0xff]
    %v142 = vld [vmem:[#allocation5 + $0xe8] sm:$0xff]
    %v143 = vld [vmem:[#allocation5 + $0xf0] sm:$0xff]
    %v144 = vld [vmem:[#allocation5 + $0xf8] sm:$0xff]
    %v145 = vld [vmem:[#allocation5 + $0x100] sm:$0xff]
    %v146 = vld [vmem:[#allocation5 + $0x108] sm:$0xff]
    %v147 = vld [vmem:[#allocation5 + $0x110] sm:$0xff]
    %v148 = vld [vmem:[#allocation5 + $0x118] sm:$0xff]
    %v149 = vld [vmem:[#allocation5 + $0x120] sm:$0xff]
    %v150 = vld [vmem:[#allocation5 + $0x128] sm:$0xff]
    %v151 = vld [vmem:[#allocation5 + $0x130] sm:$0xff]
    %v152 = vld [vmem:[#allocation5 + $0x138] sm:$0xff]
    %v153 = vld [vmem:[#allocation5 + $0x140] sm:$0xff]
    %v154 = vld [vmem:[#allocation5 + $0x148] sm:$0xff]
    %v155 = vld [vmem:[#allocation5 + $0x150] sm:$0xff]
    %v156 = vld [vmem:[#allocation5 + $0x158] sm:$0xff]
    %v157 = vld [vmem:[#allocation5 + $0x160] sm:$0xff]
    %v158 = vld [vmem:[#allocation5 + $0x168] sm:$0xff]
    %v159 = vld [vmem:[#allocation5 + $0x170] sm:$0xff]
    %v160 = vld [vmem:[#allocation5 + $0x178] sm:$0xff]
    %v161 = vld [vmem:[#allocation5 + $0x180] sm:$0xff]
    %v162 = vld [vmem:[#allocation5 + $0x188] sm:$0xff]
    %v163 = vld [vmem:[#allocation5 + $0x190] sm:$0xff]
    %v164 = vld [vmem:[#allocation5 + $0x198] sm:$0xff]
    %v165 = vld [vmem:[#allocation5 + $0x1a0] sm:$0xff]
    %v166 = vld [vmem:[#allocation5 + $0x1a8] sm:$0xff]
    %v167 = vld [vmem:[#allocation5 + $0x1b0] sm:$0xff]
    %v168 = vld [vmem:[#allocation5 + $0x1b8] sm:$0xff]
    %v169 = vld [vmem:[#allocation5 + $0x1c0] sm:$0xff]
    %v170 = vld [vmem:[#allocation5 + $0x1c8] sm:$0xff]
    %v171 = vld [vmem:[#allocation5 + $0x1d0] sm:$0xff]
    %v172 = vld [vmem:[#allocation5 + $0x1d8] sm:$0xff]
    %v173 = vld [vmem:[#allocation5 + $0x1e0] sm:$0xff]
    %v174 = vld [vmem:[#allocation5 + $0x1e8] sm:$0xff]
    %v175 = vld [vmem:[#allocation5 + $0x1f0] sm:$0xff]
    %v176 = vld [vmem:[#allocation5 + $0x1f8] sm:$0xff]
    %v177 = vld [vmem:[#allocation5 + $0x200] sm:$0xff]
    %v178 = vld [vmem:[#allocation5 + $0x208] sm:$0xff]
    %v179 = vld [vmem:[#allocation5 + $0x210] sm:$0xff]
    %v180 = vld [vmem:[#allocation5 + $0x218] sm:$0xff]
    %v181 = vld [vmem:[#allocation5 + $0x220] sm:$0xff]
    %v182 = vld [vmem:[#allocation5 + $0x228] sm:$0xff]
    %v183 = vld [vmem:[#allocation5 + $0x230] sm:$0xff]
    %v184 = vld [vmem:[#allocation5 + $0x238] sm:$0xff]
    %v185 = vld [vmem:[#allocation5 + $0x240] sm:$0xff]
    %v186 = vld [vmem:[#allocation5 + $0x248] sm:$0xff]
    %v187 = vld [vmem:[#allocation5 + $0x250] sm:$0xff]
    %v188 = vld [vmem:[#allocation5 + $0x258] sm:$0xff]
    %v189 = vld [vmem:[#allocation5 + $0x260] sm:$0xff]
    %v190 = vld [vmem:[#allocation5 + $0x268] sm:$0xff]
    %v191 = vld [vmem:[#allocation5 + $0x270] sm:$0xff]
    %v192 = vld [vmem:[#allocation5 + $0x278] sm:$0xff]
    %v193 = vld [vmem:[#allocation5 + $0x280] sm:$0xff]
    %v194 = vld [vmem:[#allocation5 + $0x288] sm:$0xff]
    %v195 = vld [vmem:[#allocation5 + $0x290] sm:$0xff]
    %v196 = vld [vmem:[#allocation5 + $0x298] sm:$0xff]
    %v197 = vld [vmem:[#allocation5 + $0x2a0] sm:$0xff]
    %v198 = vld [vmem:[#allocation5 + $0x2a8] sm:$0xff]
    %v199 = vld [vmem:[#allocation5 + $0x2b0] sm:$0xff]
    %v200 = vld [vmem:[#allocation5 + $0x2b8] sm:$0xff]
    %v201 = vld [vmem:[#allocation5 + $0x2c0] sm:$0xff]
    %v202 = vld [vmem:[#allocation5 + $0x2c8] sm:$0xff]
    %v203 = vld [vmem:[#allocation5 + $0x2d0] sm:$0xff]
    %v204 = vld [vmem:[#allocation5 + $0x2d8] sm:$0xff]
    %v205 = vld [vmem:[#allocation5 + $0x2e0] sm:$0xff]
    %v206 = vld [vmem:[#allocation5 + $0x2e8] sm:$0xff]
    %v207 = vld [vmem:[#allocation5 + $0x2f0] sm:$0xff]
    %v208 = vld [vmem:[#allocation5 + $0x2f8] sm:$0xff]
    %v209 = vld [vmem:[#allocation5 + $0x300] sm:$0xff]
    %v210 = vld [vmem:[#allocation5 + $0x308] sm:$0xff]
    %v211 = vld [vmem:[#allocation5 + $0x310] sm:$0xff]
    %v212 = vld [vmem:[#allocation5 + $0x318] sm:$0xff]
    %v213 = vld [vmem:[#allocation5 + $0x320] sm:$0xff]
    %v214 = vld [vmem:[#allocation5 + $0x328] sm:$0xff]
    %v215 = vld [vmem:[#allocation5 + $0x330] sm:$0xff]
    %v216 = vld [vmem:[#allocation5 + $0x338] sm:$0xff]
    %v217 = vld [vmem:[#allocation5 + $0x340] sm:$0xff]
    %v218 = vld [vmem:[#allocation5 + $0x348] sm:$0xff]
    %v219 = vld [vmem:[#allocation5 + $0x350] sm:$0xff]
    %v220 = vld [vmem:[#allocation5 + $0x358] sm:$0xff]
    %v221 = vld [vmem:[#allocation5 + $0x360] sm:$0xff]
    %v222 = vld [vmem:[#allocation5 + $0x368] sm:$0xff]
    %v223 = vld [vmem:[#allocation5 + $0x370] sm:$0xff]
    %v224 = vld [vmem:[#allocation5 + $0x378] sm:$0xff]
    %v225 = vld [vmem:[#allocation5 + $0x380] sm:$0xff]
    %v226 = vld [vmem:[#allocation5 + $0x388] sm:$0xff]
    %v227 = vld [vmem:[#allocation5 + $0x390] sm:$0xff]
    %v228 = vld [vmem:[#allocation5 + $0x398] sm:$0xff]
    %v229 = vld [vmem:[#allocation5 + $0x3a0] sm:$0xff]
    %v230 = vld [vmem:[#allocation5 + $0x3a8] sm:$0xff]
    %v231 = vld [vmem:[#allocation5 + $0x3b0] sm:$0xff]
    %v232 = vld [vmem:[#allocation5 + $0x3b8] sm:$0xff]
    %v233 = vld [vmem:[#allocation5 + $0x3c0] sm:$0xff]
    %v234 = vld [vmem:[#allocation5 + $0x3c8] sm:$0xff]
    %v235 = vld [vmem:[#allocation5 + $0x3d0] sm:$0xff]
    %v236 = vld [vmem:[#allocation5 + $0x3d8] sm:$0xff]
    %v237 = vld [vmem:[#allocation5 + $0x3e0] sm:$0xff]
    %v238 = vld [vmem:[#allocation5 + $0x3e8] sm:$0xff]
    %v239 = vld [vmem:[#allocation5 + $0x3f0] sm:$0xff]
    %v240 = vld [vmem:[#allocation5 + $0x3f8] sm:$0xff]
    %v241 = vld [vmem:[#allocation5 + $0x400] sm:$0xff]
    %v242 = vld [vmem:[#allocation5 + $0x408] sm:$0xff]
    %v243 = vld [vmem:[#allocation5 + $0x410] sm:$0xff]
    %v244 = vld [vmem:[#allocation5 + $0x418] sm:$0xff]
    %v245 = vld [vmem:[#allocation5 + $0x420] sm:$0xff]
    %v246 = vld [vmem:[#allocation5 + $0x428] sm:$0xff]
    %v247 = vld [vmem:[#allocation5 + $0x430] sm:$0xff]
    %v248 = vld [vmem:[#allocation5 + $0x438] sm:$0xff]
    %v249 = vld [vmem:[#allocation5 + $0x440] sm:$0xff]
    %v250 = vld [vmem:[#allocation5 + $0x448] sm:$0xff]
    %v251 = vld [vmem:[#allocation5 + $0x450] sm:$0xff]
    %v252 = vld [vmem:[#allocation5 + $0x458] sm:$0xff]
    %v253 = vld [vmem:[#allocation5 + $0x460] sm:$0xff]
    %v254 = vld [vmem:[#allocation5 + $0x468] sm:$0xff]
    %v255 = vld [vmem:[#allocation5 + $0x470] sm:$0xff]
    %v256 = vld [vmem:[#allocation5 + $0x478] sm:$0xff]
    %v257 = vld [vmem:[#allocation5 + $0x480] sm:$0xff]
    %v258 = vld [vmem:[#allocation5 + $0x488] sm:$0xff]
    %v259 = vld [vmem:[#allocation5 + $0x490] sm:$0xff]
    %v260 = vld [vmem:[#allocation5 + $0x498] sm:$0xff]
    %v261 = vld [vmem:[#allocation5 + $0x4a0] sm:$0xff]
    %v262 = vld [vmem:[#allocation5 + $0x4a8] sm:$0xff]
    %v263 = vld [vmem:[#allocation5 + $0x4b0] sm:$0xff]
    %v264 = vld [vmem:[#allocation5 + $0x4b8] sm:$0xff]
    %v265 = vld [vmem:[#allocation5 + $0x4c0] sm:$0xff]
    %v266 = vld [vmem:[#allocation5 + $0x4c8] sm:$0xff]
    %v267 = vld [vmem:[#allocation5 + $0x4d0] sm:$0xff]
    %v268 = vld [vmem:[#allocation5 + $0x4d8] sm:$0xff]
    %v269 = vld [vmem:[#allocation5 + $0x4e0] sm:$0xff]
    %v270 = vld [vmem:[#allocation5 + $0x4e8] sm:$0xff]
    %v271 = vld [vmem:[#allocation5 + $0x4f0] sm:$0xff]
    %v272 = vld [vmem:[#allocation5 + $0x4f8] sm:$0xff]
    %v273 = vld [vmem:[#allocation5 + $0x500] sm:$0xff]
    %v274 = vld [vmem:[#allocation5 + $0x508] sm:$0xff]
    %v275 = vld [vmem:[#allocation5 + $0x510] sm:$0xff]
    %v276 = vld [vmem:[#allocation5 + $0x518] sm:$0xff]
    %v277 = vld [vmem:[#allocation5 + $0x520] sm:$0xff]
    %v278 = vld [vmem:[#allocation5 + $0x528] sm:$0xff]
    %v279 = vld [vmem:[#allocation5 + $0x530] sm:$0xff]
    %v280 = vld [vmem:[#allocation5 + $0x538] sm:$0xff]
    %v281 = vld [vmem:[#allocation5 + $0x540] sm:$0xff]
    %v282 = vld [vmem:[#allocation5 + $0x548] sm:$0xff]
    %v283 = vld [vmem:[#allocation5 + $0x550] sm:$0xff]
    %v284 = vld [vmem:[#allocation5 + $0x558] sm:$0xff]
    %v285 = vld [vmem:[#allocation5 + $0x560] sm:$0xff]
    %v286 = vld [vmem:[#allocation5 + $0x568] sm:$0xff]
    %v287 = vld [vmem:[#allocation5 + $0x570] sm:$0xff]
    %v288 = vld [vmem:[#allocation5 + $0x578] sm:$0xff]
    %v289 = vld [vmem:[#allocation5 + $0x580] sm:$0xff]
    %v290 = vld [vmem:[#allocation5 + $0x588] sm:$0xff]
    %v291 = vld [vmem:[#allocation5 + $0x590] sm:$0xff]
    %v292 = vld [vmem:[#allocation5 + $0x598] sm:$0xff]
    %v293 = vld [vmem:[#allocation5 + $0x5a0] sm:$0xff]
    %v294 = vld [vmem:[#allocation5 + $0x5a8] sm:$0xff]
    %v295 = vld [vmem:[#allocation5 + $0x5b0] sm:$0xff]
    %v296 = vld [vmem:[#allocation5 + $0x5b8] sm:$0xff]
    %v297 = vld [vmem:[#allocation5 + $0x5c0] sm:$0xff]
    %v298 = vld [vmem:[#allocation5 + $0x5c8] sm:$0xff]
    %v299 = vld [vmem:[#allocation5 + $0x5d0] sm:$0xff]
    %v300 = vld [vmem:[#allocation5 + $0x5d8] sm:$0xff]
    %v301 = vld [vmem:[#allocation5 + $0x5e0] sm:$0xff]
    %v302 = vld [vmem:[#allocation5 + $0x5e8] sm:$0xff]
    %v303 = vld [vmem:[#allocation5 + $0x5f0] sm:$0xff]
    %v304 = vld [vmem:[#allocation5 + $0x5f8] sm:$0xff]
    %v305 = vld [vmem:[#allocation5 + $0x600] sm:$0xff]
    %v306 = vld [vmem:[#allocation5 + $0x608] sm:$0xff]
    %v307 = vld [vmem:[#allocation5 + $0x610] sm:$0xff]
    %v308 = vld [vmem:[#allocation5 + $0x618] sm:$0xff]
    %v310 = vperm.slane %v103, 0
    %v311 = vperm.slane %v103, 1
    %v312 = vperm.slane %v103, 2
    %v313 = vperm.slane %v103, 3
    %v514 = vunpack.c.l.b16 %v113
    %v515 = vunpack.c.h.b16 %v113
    %v516 = vunpack.c.l.b16 %v114
    %v517 = vunpack.c.h.b16 %v114
    %v518 = vunpack.c.l.b16 %v115
    %v519 = vunpack.c.h.b16 %v115
    %v520 = vunpack.c.l.b16 %v116
    %v521 = vunpack.c.h.b16 %v116
    %v522 = vunpack.c.l.b16 %v117
    %v523 = vunpack.c.h.b16 %v117
    %v524 = vunpack.c.l.b16 %v118
    %v525 = vunpack.c.h.b16 %v118
    %v526 = vunpack.c.l.b16 %v119
    %v527 = vunpack.c.h.b16 %v119
    %v528 = vunpack.c.l.b16 %v120
    %v529 = vunpack.c.h.b16 %v120
    %v530 = vunpack.c.l.b16 %v121
    %v531 = vunpack.c.h.b16 %v121
    %v532 = vunpack.c.l.b16 %v122
    %v533 = vunpack.c.h.b16 %v122
    %v534 = vunpack.c.l.b16 %v123
    %v535 = vunpack.c.h.b16 %v123
    %v536 = vunpack.c.l.b16 %v124
    %v537 = vunpack.c.h.b16 %v124
    %v538 = vunpack.c.l.b16 %v125
    %v539 = vunpack.c.h.b16 %v125
    %v540 = vunpack.c.l.b16 %v126
    %v541 = vunpack.c.h.b16 %v126
    %v542 = vunpack.c.l.b16 %v127
    %v543 = vunpack.c.h.b16 %v127
    %v544 = vunpack.c.l.b16 %v128
    %v545 = vunpack.c.h.b16 %v128
    %v546 = vunpack.c.l.b16 %v129
    %v547 = vunpack.c.h.b16 %v129
    %v548 = vunpack.c.l.b16 %v130
    %v549 = vunpack.c.h.b16 %v130
    %v550 = vunpack.c.l.b16 %v131
    %v551 = vunpack.c.h.b16 %v131
    %v552 = vunpack.c.l.b16 %v132
    %v553 = vunpack.c.h.b16 %v132
    %v554 = vunpack.c.l.b16 %v133
    %v555 = vunpack.c.h.b16 %v133
    %v556 = vunpack.c.l.b16 %v134
    %v557 = vunpack.c.h.b16 %v134
    %v558 = vunpack.c.l.b16 %v135
    %v559 = vunpack.c.h.b16 %v135
    %v560 = vunpack.c.l.b16 %v136
    %v561 = vunpack.c.h.b16 %v136
    %v562 = vunpack.c.l.b16 %v137
    %v563 = vunpack.c.h.b16 %v137
    %v564 = vunpack.c.l.b16 %v138
    %v565 = vunpack.c.h.b16 %v138
    %v566 = vunpack.c.l.b16 %v139
    %v567 = vunpack.c.h.b16 %v139
    %v568 = vunpack.c.l.b16 %v140
    %v569 = vunpack.c.h.b16 %v140
    %v570 = vunpack.c.l.b16 %v141
    %v571 = vunpack.c.h.b16 %v141
    %v572 = vunpack.c.l.b16 %v142
    %v573 = vunpack.c.h.b16 %v142
    %v574 = vunpack.c.l.b16 %v143
    %v575 = vunpack.c.h.b16 %v143
    %v576 = vunpack.c.l.b16 %v144
    %v577 = vunpack.c.h.b16 %v144
    %v578 = vunpack.c.l.b16 %v145
    %v579 = vunpack.c.h.b16 %v145
    %v580 = vunpack.c.l.b16 %v146
    %v581 = vunpack.c.h.b16 %v146
    %v582 = vunpack.c.l.b16 %v147
    %v583 = vunpack.c.h.b16 %v147
    %v584 = vunpack.c.l.b16 %v148
    %v585 = vunpack.c.h.b16 %v148
    %v586 = vunpack.c.l.b16 %v149
    %v587 = vunpack.c.h.b16 %v149
    %v588 = vunpack.c.l.b16 %v150
    %v589 = vunpack.c.h.b16 %v150
    %v590 = vunpack.c.l.b16 %v151
    %v591 = vunpack.c.h.b16 %v151
    %v592 = vunpack.c.l.b16 %v152
    %v593 = vunpack.c.h.b16 %v152
    %v594 = vunpack.c.l.b16 %v153
    %v595 = vunpack.c.h.b16 %v153
    %v596 = vunpack.c.l.b16 %v154
    %v597 = vunpack.c.h.b16 %v154
    %v598 = vunpack.c.l.b16 %v155
    %v599 = vunpack.c.h.b16 %v155
    %v600 = vunpack.c.l.b16 %v156
    %v601 = vunpack.c.h.b16 %v156
    %v602 = vunpack.c.l.b16 %v157
    %v603 = vunpack.c.h.b16 %v157
    %v604 = vunpack.c.l.b16 %v158
    %v605 = vunpack.c.h.b16 %v158
    %v606 = vunpack.c.l.b16 %v159
    %v607 = vunpack.c.h.b16 %v159
    %v608 = vunpack.c.l.b16 %v160
    %v609 = vunpack.c.h.b16 %v160
    %v610 = vunpack.c.l.b16 %v161
    %v611 = vunpack.c.h.b16 %v161
    %v612 = vunpack.c.l.b16 %v162
    %v613 = vunpack.c.h.b16 %v162
    %v614 = vunpack.c.l.b16 %v163
    %v615 = vunpack.c.h.b16 %v163
    %v616 = vunpack.c.l.b16 %v164
    %v617 = vunpack.c.h.b16 %v164
    %v618 = vunpack.c.l.b16 %v165
    %v619 = vunpack.c.h.b16 %v165
    %v620 = vunpack.c.l.b16 %v166
    %v621 = vunpack.c.h.b16 %v166
    %v622 = vunpack.c.l.b16 %v167
    %v623 = vunpack.c.h.b16 %v167
    %v624 = vunpack.c.l.b16 %v168
    %v625 = vunpack.c.h.b16 %v168
    %v626 = vunpack.c.l.b16 %v169
    %v627 = vunpack.c.h.b16 %v169
    %v628 = vunpack.c.l.b16 %v170
    %v629 = vunpack.c.h.b16 %v170
    %v630 = vunpack.c.l.b16 %v171
    %v631 = vunpack.c.h.b16 %v171
    %v632 = vunpack.c.l.b16 %v172
    %v633 = vunpack.c.h.b16 %v172
    %v634 = vunpack.c.l.b16 %v173
    %v635 = vunpack.c.h.b16 %v173
    %v636 = vunpack.c.l.b16 %v174
    %v637 = vunpack.c.h.b16 %v174
    %v638 = vunpack.c.l.b16 %v175
    %v639 = vunpack.c.h.b16 %v175
    %v640 = vunpack.c.l.b16 %v176
    %v641 = vunpack.c.h.b16 %v176
    %v642 = vunpack.c.l.b16 %v177
    %v643 = vunpack.c.h.b16 %v177
    %v644 = vunpack.c.l.b16 %v178
    %v645 = vunpack.c.h.b16 %v178
    %v646 = vunpack.c.l.b16 %v179
    %v647 = vunpack.c.h.b16 %v179
    %v648 = vunpack.c.l.b16 %v180
    %v649 = vunpack.c.h.b16 %v180
    %v650 = vunpack.c.l.b16 %v181
    %v651 = vunpack.c.h.b16 %v181
    %v652 = vunpack.c.l.b16 %v182
    %v653 = vunpack.c.h.b16 %v182
    %v654 = vunpack.c.l.b16 %v183
    %v655 = vunpack.c.h.b16 %v183
    %v656 = vunpack.c.l.b16 %v184
    %v657 = vunpack.c.h.b16 %v184
    %v658 = vunpack.c.l.b16 %v185
    %v659 = vunpack.c.h.b16 %v185
    %v660 = vunpack.c.l.b16 %v186
    %v661 = vunpack.c.h.b16 %v186
    %v662 = vunpack.c.l.b16 %v187
    %v663 = vunpack.c.h.b16 %v187
    %v664 = vunpack.c.l.b16 %v188
    %v665 = vunpack.c.h.b16 %v188
    %v666 = vunpack.c.l.b16 %v189
    %v667 = vunpack.c.h.b16 %v189
    %v668 = vunpack.c.l.b16 %v190
    %v669 = vunpack.c.h.b16 %v190
    %v670 = vunpack.c.l.b16 %v191
    %v671 = vunpack.c.h.b16 %v191
    %v672 = vunpack.c.l.b16 %v192
    %v673 = vunpack.c.h.b16 %v192
    %v674 = vunpack.c.l.b16 %v193
    %v675 = vunpack.c.h.b16 %v193
    %v676 = vunpack.c.l.b16 %v194
    %v677 = vunpack.c.h.b16 %v194
    %v678 = vunpack.c.l.b16 %v195
    %v679 = vunpack.c.h.b16 %v195
    %v680 = vunpack.c.l.b16 %v196
    %v681 = vunpack.c.h.b16 %v196
    %v682 = vunpack.c.l.b16 %v197
    %v683 = vunpack.c.h.b16 %v197
    %v684 = vunpack.c.l.b16 %v198
    %v685 = vunpack.c.h.b16 %v198
    %v686 = vunpack.c.l.b16 %v199
    %v687 = vunpack.c.h.b16 %v199
    %v688 = vunpack.c.l.b16 %v200
    %v689 = vunpack.c.h.b16 %v200
    %v690 = vunpack.c.l.b16 %v201
    %v691 = vunpack.c.h.b16 %v201
    %v692 = vunpack.c.l.b16 %v202
    %v693 = vunpack.c.h.b16 %v202
    %v694 = vunpack.c.l.b16 %v203
    %v695 = vunpack.c.h.b16 %v203
    %v696 = vunpack.c.l.b16 %v204
    %v697 = vunpack.c.h.b16 %v204
    %v698 = vunpack.c.l.b16 %v205
    %v699 = vunpack.c.h.b16 %v205
    %v700 = vunpack.c.l.b16 %v206
    %v701 = vunpack.c.h.b16 %v206
    %v702 = vunpack.c.l.b16 %v207
    %v703 = vunpack.c.h.b16 %v207
    %v704 = vunpack.c.l.b16 %v208
    %v705 = vunpack.c.h.b16 %v208
    %v706 = vunpack.c.l.b16 %v209
    %v707 = vunpack.c.h.b16 %v209
    %v708 = vunpack.c.l.b16 %v210
    %v709 = vunpack.c.h.b16 %v210
    %v710 = vunpack.c.l.b16 %v211
    %v711 = vunpack.c.h.b16 %v211
    %v712 = vunpack.c.l.b16 %v212
    %v713 = vunpack.c.h.b16 %v212
    %v714 = vunpack.c.l.b16 %v213
    %v715 = vunpack.c.h.b16 %v213
    %v716 = vunpack.c.l.b16 %v214
    %v717 = vunpack.c.h.b16 %v214
    %v718 = vunpack.c.l.b16 %v215
    %v719 = vunpack.c.h.b16 %v215
    %v720 = vunpack.c.l.b16 %v216
    %v721 = vunpack.c.h.b16 %v216
    %v722 = vunpack.c.l.b16 %v217
    %v723 = vunpack.c.h.b16 %v217
    %v724 = vunpack.c.l.b16 %v218
    %v725 = vunpack.c.h.b16 %v218
    %v726 = vunpack.c.l.b16 %v219
    %v727 = vunpack.c.h.b16 %v219
    %v728 = vunpack.c.l.b16 %v220
    %v729 = vunpack.c.h.b16 %v220
    %v730 = vunpack.c.l.b16 %v221
    %v731 = vunpack.c.h.b16 %v221
    %v732 = vunpack.c.l.b16 %v222
    %v733 = vunpack.c.h.b16 %v222
    %v734 = vunpack.c.l.b16 %v223
    %v735 = vunpack.c.h.b16 %v223
    %v736 = vunpack.c.l.b16 %v224
    %v737 = vunpack.c.h.b16 %v224
    %v738 = vunpack.c.l.b16 %v225
    %v739 = vunpack.c.h.b16 %v225
    %v740 = vunpack.c.l.b16 %v226
    %v741 = vunpack.c.h.b16 %v226
    %v742 = vunpack.c.l.b16 %v227
    %v743 = vunpack.c.h.b16 %v227
    %v744 = vunpack.c.l.b16 %v228
    %v745 = vunpack.c.h.b16 %v228
    %v746 = vunpack.c.l.b16 %v229
    %v747 = vunpack.c.h.b16 %v229
    %v748 = vunpack.c.l.b16 %v230
    %v749 = vunpack.c.h.b16 %v230
    %v750 = vunpack.c.l.b16 %v231
    %v751 = vunpack.c.h.b16 %v231
    %v752 = vunpack.c.l.b16 %v232
    %v753 = vunpack.c.h.b16 %v232
    %v754 = vunpack.c.l.b16 %v233
    %v755 = vunpack.c.h.b16 %v233
    %v756 = vunpack.c.l.b16 %v234
    %v757 = vunpack.c.h.b16 %v234
    %v758 = vunpack.c.l.b16 %v235
    %v759 = vunpack.c.h.b16 %v235
    %v760 = vunpack.c.l.b16 %v236
    %v761 = vunpack.c.h.b16 %v236
    %v762 = vunpack.c.l.b16 %v237
    %v763 = vunpack.c.h.b16 %v237
    %v764 = vunpack.c.l.b16 %v238
    %v765 = vunpack.c.h.b16 %v238
    %v766 = vunpack.c.l.b16 %v239
    %v767 = vunpack.c.h.b16 %v239
    %v768 = vunpack.c.l.b16 %v240
    %v769 = vunpack.c.h.b16 %v240
    %v770 = vunpack.c.l.b16 %v241
    %v771 = vunpack.c.h.b16 %v241
    %v772 = vunpack.c.l.b16 %v242
    %v773 = vunpack.c.h.b16 %v242
    %v774 = vunpack.c.l.b16 %v243
    %v775 = vunpack.c.h.b16 %v243
    %v776 = vunpack.c.l.b16 %v244
    %v777 = vunpack.c.h.b16 %v244
    %v778 = vunpack.c.l.b16 %v245
    %v779 = vunpack.c.h.b16 %v245
    %v780 = vunpack.c.l.b16 %v246
    %v781 = vunpack.c.h.b16 %v246
    %v782 = vunpack.c.l.b16 %v247
    %v783 = vunpack.c.h.b16 %v247
    %v784 = vunpack.c.l.b16 %v248
    %v785 = vunpack.c.h.b16 %v248
    %v786 = vunpack.c.l.b16 %v249
    %v787 = vunpack.c.h.b16 %v249
    %v788 = vunpack.c.l.b16 %v250
    %v789 = vunpack.c.h.b16 %v250
    %v790 = vunpack.c.l.b16 %v251
    %v791 = vunpack.c.h.b16 %v251
    %v792 = vunpack.c.l.b16 %v252
    %v793 = vunpack.c.h.b16 %v252
    %v794 = vunpack.c.l.b16 %v253
    %v795 = vunpack.c.h.b16 %v253
    %v796 = vunpack.c.l.b16 %v254
    %v797 = vunpack.c.h.b16 %v254
    %v798 = vunpack.c.l.b16 %v255
    %v799 = vunpack.c.h.b16 %v255
    %v800 = vunpack.c.l.b16 %v256
    %v801 = vunpack.c.h.b16 %v256
    %v802 = vunpack.c.l.b16 %v257
    %v803 = vunpack.c.h.b16 %v257
    %v804 = vunpack.c.l.b16 %v258
    %v805 = vunpack.c.h.b16 %v258
    %v806 = vunpack.c.l.b16 %v259
    %v807 = vunpack.c.h.b16 %v259
    %v808 = vunpack.c.l.b16 %v260
    %v809 = vunpack.c.h.b16 %v260
    %v810 = vunpack.c.l.b16 %v261
    %v811 = vunpack.c.h.b16 %v261
    %v812 = vunpack.c.l.b16 %v262
    %v813 = vunpack.c.h.b16 %v262
    %v814 = vunpack.c.l.b16 %v263
    %v815 = vunpack.c.h.b16 %v263
    %v816 = vunpack.c.l.b16 %v264
    %v817 = vunpack.c.h.b16 %v264
    %v818 = vunpack.c.l.b16 %v265
    %v819 = vunpack.c.h.b16 %v265
    %v820 = vunpack.c.l.b16 %v266
    %v821 = vunpack.c.h.b16 %v266
    %v822 = vunpack.c.l.b16 %v267
    %v823 = vunpack.c.h.b16 %v267
    %v824 = vunpack.c.l.b16 %v268
    %v825 = vunpack.c.h.b16 %v268
    %v826 = vunpack.c.l.b16 %v269
    %v827 = vunpack.c.h.b16 %v269
    %v828 = vunpack.c.l.b16 %v270
    %v829 = vunpack.c.h.b16 %v270
    %v830 = vunpack.c.l.b16 %v271
    %v831 = vunpack.c.h.b16 %v271
    %v832 = vunpack.c.l.b16 %v272
    %v833 = vunpack.c.h.b16 %v272
    %v834 = vunpack.c.l.b16 %v273
    %v835 = vunpack.c.h.b16 %v273
    %v836 = vunpack.c.l.b16 %v274
    %v837 = vunpack.c.h.b16 %v274
    %v838 = vunpack.c.l.b16 %v275
    %v839 = vunpack.c.h.b16 %v275
    %v840 = vunpack.c.l.b16 %v276
    %v841 = vunpack.c.h.b16 %v276
    %v842 = vunpack.c.l.b16 %v277
    %v843 = vunpack.c.h.b16 %v277
    %v844 = vunpack.c.l.b16 %v278
    %v845 = vunpack.c.h.b16 %v278
    %v846 = vunpack.c.l.b16 %v279
    %v847 = vunpack.c.h.b16 %v279
    %v848 = vunpack.c.l.b16 %v280
    %v849 = vunpack.c.h.b16 %v280
    %v850 = vunpack.c.l.b16 %v281
    %v851 = vunpack.c.h.b16 %v281
    %v852 = vunpack.c.l.b16 %v282
    %v853 = vunpack.c.h.b16 %v282
    %v854 = vunpack.c.l.b16 %v283
    %v855 = vunpack.c.h.b16 %v283
    %v856 = vunpack.c.l.b16 %v284
    %v857 = vunpack.c.h.b16 %v284
    %v858 = vunpack.c.l.b16 %v285
    %v859 = vunpack.c.h.b16 %v285
    %v860 = vunpack.c.l.b16 %v286
    %v861 = vunpack.c.h.b16 %v286
    %v862 = vunpack.c.l.b16 %v287
    %v863 = vunpack.c.h.b16 %v287
    %v864 = vunpack.c.l.b16 %v288
    %v865 = vunpack.c.h.b16 %v288
    %v866 = vunpack.c.l.b16 %v289
    %v867 = vunpack.c.h.b16 %v289
    %v868 = vunpack.c.l.b16 %v290
    %v869 = vunpack.c.h.b16 %v290
    %v870 = vunpack.c.l.b16 %v291
    %v871 = vunpack.c.h.b16 %v291
    %v872 = vunpack.c.l.b16 %v292
    %v873 = vunpack.c.h.b16 %v292
    %v874 = vunpack.c.l.b16 %v293
    %v875 = vunpack.c.h.b16 %v293
    %v876 = vunpack.c.l.b16 %v294
    %v877 = vunpack.c.h.b16 %v294
    %v878 = vunpack.c.l.b16 %v295
    %v879 = vunpack.c.h.b16 %v295
    %v880 = vunpack.c.l.b16 %v296
    %v881 = vunpack.c.h.b16 %v296
    %v882 = vunpack.c.l.b16 %v297
    %v883 = vunpack.c.h.b16 %v297
    %v884 = vunpack.c.l.b16 %v298
    %v885 = vunpack.c.h.b16 %v298
    %v886 = vunpack.c.l.b16 %v299
    %v887 = vunpack.c.h.b16 %v299
    %v888 = vunpack.c.l.b16 %v300
    %v889 = vunpack.c.h.b16 %v300
    %v890 = vunpack.c.l.b16 %v301
    %v891 = vunpack.c.h.b16 %v301
    %v892 = vunpack.c.l.b16 %v302
    %v893 = vunpack.c.h.b16 %v302
    %v894 = vunpack.c.l.b16 %v303
    %v895 = vunpack.c.h.b16 %v303
    %v896 = vunpack.c.l.b16 %v304
    %v897 = vunpack.c.h.b16 %v304
    %v898 = vunpack.c.l.b16 %v305
    %v899 = vunpack.c.h.b16 %v305
    %v900 = vunpack.c.l.b16 %v306
    %v901 = vunpack.c.h.b16 %v306
    %v902 = vunpack.c.l.b16 %v307
    %v903 = vunpack.c.h.b16 %v307
    %v904 = vunpack.c.l.b16 %v308
    %v905 = vunpack.c.h.b16 %v308
    %v906 = vpack.c.b16 %v518, %v514
    %v907 = vpack.c.b16 %v519, %v515
    %v908 = vpack.c.b16 %v520, %v516
    %v909 = vpack.c.b16 %v521, %v517
    %v910 = vpack.c.b16 %v526, %v522
    %v911 = vpack.c.b16 %v527, %v523
    %v912 = vpack.c.b16 %v528, %v524
    %v913 = vpack.c.b16 %v529, %v525
    %v914 = vpack.c.b16 %v534, %v530
    %v915 = vpack.c.b16 %v535, %v531
    %v916 = vpack.c.b16 %v536, %v532
    %v917 = vpack.c.b16 %v537, %v533
    %v918 = vpack.c.b16 %v542, %v538
    %v919 = vpack.c.b16 %v543, %v539
    %v920 = vpack.c.b16 %v544, %v540
    %v921 = vpack.c.b16 %v545, %v541
    %v922 = vpack.c.b16 %v550, %v546
    %v923 = vpack.c.b16 %v551, %v547
    %v924 = vpack.c.b16 %v552, %v548
    %v925 = vpack.c.b16 %v553, %v549
    %v926 = vpack.c.b16 %v558, %v554
    %v927 = vpack.c.b16 %v559, %v555
    %v928 = vpack.c.b16 %v560, %v556
    %v929 = vpack.c.b16 %v561, %v557
    %v930 = vpack.c.b16 %v566, %v562
    %v931 = vpack.c.b16 %v567, %v563
    %v932 = vpack.c.b16 %v568, %v564
    %v933 = vpack.c.b16 %v569, %v565
    %v934 = vpack.c.b16 %v574, %v570
    %v935 = vpack.c.b16 %v575, %v571
    %v936 = vpack.c.b16 %v576, %v572
    %v937 = vpack.c.b16 %v577, %v573
    %v938 = vpack.c.b16 %v582, %v578
    %v939 = vpack.c.b16 %v583, %v579
    %v940 = vpack.c.b16 %v584, %v580
    %v941 = vpack.c.b16 %v585, %v581
    %v942 = vpack.c.b16 %v590, %v586
    %v943 = vpack.c.b16 %v591, %v587
    %v944 = vpack.c.b16 %v592, %v588
    %v945 = vpack.c.b16 %v593, %v589
    %v946 = vpack.c.b16 %v598, %v594
    %v947 = vpack.c.b16 %v599, %v595
    %v948 = vpack.c.b16 %v600, %v596
    %v949 = vpack.c.b16 %v601, %v597
    %v950 = vpack.c.b16 %v606, %v602
    %v951 = vpack.c.b16 %v607, %v603
    %v952 = vpack.c.b16 %v608, %v604
    %v953 = vpack.c.b16 %v609, %v605
    %v954 = vpack.c.b16 %v614, %v610
    %v955 = vpack.c.b16 %v615, %v611
    %v956 = vpack.c.b16 %v616, %v612
    %v957 = vpack.c.b16 %v617, %v613
    %v958 = vpack.c.b16 %v622, %v618
    %v959 = vpack.c.b16 %v623, %v619
    %v960 = vpack.c.b16 %v624, %v620
    %v961 = vpack.c.b16 %v625, %v621
    %v962 = vpack.c.b16 %v630, %v626
    %v963 = vpack.c.b16 %v631, %v627
    %v964 = vpack.c.b16 %v632, %v628
    %v965 = vpack.c.b16 %v633, %v629
    %v966 = vpack.c.b16 %v638, %v634
    %v967 = vpack.c.b16 %v639, %v635
    %v968 = vpack.c.b16 %v640, %v636
    %v969 = vpack.c.b16 %v641, %v637
    %v970 = vpack.c.b16 %v646, %v642
    %v971 = vpack.c.b16 %v647, %v643
    %v972 = vpack.c.b16 %v648, %v644
    %v973 = vpack.c.b16 %v649, %v645
    %v974 = vpack.c.b16 %v654, %v650
    %v975 = vpack.c.b16 %v655, %v651
    %v976 = vpack.c.b16 %v656, %v652
    %v977 = vpack.c.b16 %v657, %v653
    %v978 = vpack.c.b16 %v662, %v658
    %v979 = vpack.c.b16 %v663, %v659
    %v980 = vpack.c.b16 %v664, %v660
    %v981 = vpack.c.b16 %v665, %v661
    %v982 = vpack.c.b16 %v670, %v666
    %v983 = vpack.c.b16 %v671, %v667
    %v984 = vpack.c.b16 %v672, %v668
    %v985 = vpack.c.b16 %v673, %v669
    %v986 = vpack.c.b16 %v678, %v674
    %v987 = vpack.c.b16 %v679, %v675
    %v988 = vpack.c.b16 %v680, %v676
    %v989 = vpack.c.b16 %v681, %v677
    %v990 = vpack.c.b16 %v686, %v682
    %v991 = vpack.c.b16 %v687, %v683
    %v992 = vpack.c.b16 %v688, %v684
    %v993 = vpack.c.b16 %v689, %v685
    %v994 = vpack.c.b16 %v694, %v690
    %v995 = vpack.c.b16 %v695, %v691
    %v996 = vpack.c.b16 %v696, %v692
    %v997 = vpack.c.b16 %v697, %v693
    %v998 = vpack.c.b16 %v702, %v698
    %v999 = vpack.c.b16 %v703, %v699
    %v1000 = vpack.c.b16 %v704, %v700
    %v1001 = vpack.c.b16 %v705, %v701
    %v1002 = vpack.c.b16 %v710, %v706
    %v1003 = vpack.c.b16 %v711, %v707
    %v1004 = vpack.c.b16 %v712, %v708
    %v1005 = vpack.c.b16 %v713, %v709
    %v1006 = vpack.c.b16 %v718, %v714
    %v1007 = vpack.c.b16 %v719, %v715
    %v1008 = vpack.c.b16 %v720, %v716
    %v1009 = vpack.c.b16 %v721, %v717
    %v1010 = vpack.c.b16 %v726, %v722
    %v1011 = vpack.c.b16 %v727, %v723
    %v1012 = vpack.c.b16 %v728, %v724
    %v1013 = vpack.c.b16 %v729, %v725
    %v1014 = vpack.c.b16 %v734, %v730
    %v1015 = vpack.c.b16 %v735, %v731
    %v1016 = vpack.c.b16 %v736, %v732
    %v1017 = vpack.c.b16 %v737, %v733
    %v1018 = vpack.c.b16 %v742, %v738
    %v1019 = vpack.c.b16 %v743, %v739
    %v1020 = vpack.c.b16 %v744, %v740
    %v1021 = vpack.c.b16 %v745, %v741
    %v1022 = vpack.c.b16 %v750, %v746
    %v1023 = vpack.c.b16 %v751, %v747
    %v1024 = vpack.c.b16 %v752, %v748
    %v1025 = vpack.c.b16 %v753, %v749
    %v1026 = vpack.c.b16 %v758, %v754
    %v1027 = vpack.c.b16 %v759, %v755
    %v1028 = vpack.c.b16 %v760, %v756
    %v1029 = vpack.c.b16 %v761, %v757
    %v1030 = vpack.c.b16 %v766, %v762
    %v1031 = vpack.c.b16 %v767, %v763
    %v1032 = vpack.c.b16 %v768, %v764
    %v1033 = vpack.c.b16 %v769, %v765
    %v1034 = vpack.c.b16 %v774, %v770
    %v1035 = vpack.c.b16 %v775, %v771
    %v1036 = vpack.c.b16 %v776, %v772
    %v1037 = vpack.c.b16 %v777, %v773
    %v1038 = vpack.c.b16 %v782, %v778
    %v1039 = vpack.c.b16 %v783, %v779
    %v1040 = vpack.c.b16 %v784, %v780
    %v1041 = vpack.c.b16 %v785, %v781
    %v1042 = vpack.c.b16 %v790, %v786
    %v1043 = vpack.c.b16 %v791, %v787
    %v1044 = vpack.c.b16 %v792, %v788
    %v1045 = vpack.c.b16 %v793, %v789
    %v1046 = vpack.c.b16 %v798, %v794
    %v1047 = vpack.c.b16 %v799, %v795
    %v1048 = vpack.c.b16 %v800, %v796
    %v1049 = vpack.c.b16 %v801, %v797
    %v1050 = vpack.c.b16 %v806, %v802
    %v1051 = vpack.c.b16 %v807, %v803
    %v1052 = vpack.c.b16 %v808, %v804
    %v1053 = vpack.c.b16 %v809, %v805
    %v1054 = vpack.c.b16 %v814, %v810
    %v1055 = vpack.c.b16 %v815, %v811
    %v1056 = vpack.c.b16 %v816, %v812
    %v1057 = vpack.c.b16 %v817, %v813
    %v1058 = vpack.c.b16 %v822, %v818
    %v1059 = vpack.c.b16 %v823, %v819
    %v1060 = vpack.c.b16 %v824, %v820
    %v1061 = vpack.c.b16 %v825, %v821
    %v1062 = vpack.c.b16 %v830, %v826
    %v1063 = vpack.c.b16 %v831, %v827
    %v1064 = vpack.c.b16 %v832, %v828
    %v1065 = vpack.c.b16 %v833, %v829
    %v1066 = vpack.c.b16 %v838, %v834
    %v1067 = vpack.c.b16 %v839, %v835
    %v1068 = vpack.c.b16 %v840, %v836
    %v1069 = vpack.c.b16 %v841, %v837
    %v1070 = vpack.c.b16 %v846, %v842
    %v1071 = vpack.c.b16 %v847, %v843
    %v1072 = vpack.c.b16 %v848, %v844
    %v1073 = vpack.c.b16 %v849, %v845
    %v1074 = vpack.c.b16 %v854, %v850
    %v1075 = vpack.c.b16 %v855, %v851
    %v1076 = vpack.c.b16 %v856, %v852
    %v1077 = vpack.c.b16 %v857, %v853
    %v1078 = vpack.c.b16 %v862, %v858
    %v1079 = vpack.c.b16 %v863, %v859
    %v1080 = vpack.c.b16 %v864, %v860
    %v1081 = vpack.c.b16 %v865, %v861
    %v1082 = vpack.c.b16 %v870, %v866
    %v1083 = vpack.c.b16 %v871, %v867
    %v1084 = vpack.c.b16 %v872, %v868
    %v1085 = vpack.c.b16 %v873, %v869
    %v1086 = vpack.c.b16 %v878, %v874
    %v1087 = vpack.c.b16 %v879, %v875
    %v1088 = vpack.c.b16 %v880, %v876
    %v1089 = vpack.c.b16 %v881, %v877
    %v1090 = vpack.c.b16 %v886, %v882
    %v1091 = vpack.c.b16 %v887, %v883
    %v1092 = vpack.c.b16 %v888, %v884
    %v1093 = vpack.c.b16 %v889, %v885
    %v1094 = vpack.c.b16 %v894, %v890
    %v1095 = vpack.c.b16 %v895, %v891
    %v1096 = vpack.c.b16 %v896, %v892
    %v1097 = vpack.c.b16 %v897, %v893
    %v1098 = vpack.c.b16 %v902, %v898
    %v1099 = vpack.c.b16 %v903, %v899
    %v1100 = vpack.c.b16 %v904, %v900
    %v1101 = vpack.c.b16 %v905, %v901
    %vm1298 = vcmask 130048
    %v1300 = vsel %vm1298, %v112, 0
    %1302 = vmatpush.bf16.msra.mxu0 %v934
    %1303 = vmatpush.bf16.msra.mxu0 %v930
    %1304 = vmatpush.bf16.msra.mxu0 %v926
    %1305 = vmatpush.bf16.msra.mxu0 %v922
    %1306 = vmatpush.bf16.msra.mxu0 %v918
    %1307 = vmatpush.bf16.msra.mxu0 %v914
    %1308 = vmatpush.bf16.msra.mxu0 %v910
    %1309 = vmatpush.bf16.msra.mxu0 %v906
    %1310 = vmatmul.bf16.gmra.mxu0 %v106
    %v1311 = vpop.f32.mrf.mxu0
    %v1312 = vadd.f32 %v310, %v1311
    %v1313 = vpop.f32.mrf.mxu0
    %1314 = vdwg.mxu0
    %1315 = vmatpush.bf16.msra.mxu0 %v966
    %1316 = vmatpush.bf16.msra.mxu0 %v962
    %1317 = vmatpush.bf16.msra.mxu0 %v958
    %1318 = vmatpush.bf16.msra.mxu0 %v954
    %1319 = vmatpush.bf16.msra.mxu0 %v950
    %1320 = vmatpush.bf16.msra.mxu0 %v946
    %1321 = vmatpush.bf16.msra.mxu0 %v942
    %1322 = vmatpush.bf16.msra.mxu0 %v938
    %1323 = vmatmul.bf16.gmra.mxu0 %v107
    %v1324 = vpop.f32.mrf.mxu0
    %v1325 = vadd.f32 %v1312, %v1324
    %v1326 = vpop.f32.mrf.mxu0
    %1327 = vdwg.mxu0
    %1328 = vmatpush.bf16.msra.mxu0 %v998
    %1329 = vmatpush.bf16.msra.mxu0 %v994
    %1330 = vmatpush.bf16.msra.mxu0 %v990
    %1331 = vmatpush.bf16.msra.mxu0 %v986
    %1332 = vmatpush.bf16.msra.mxu0 %v982
    %1333 = vmatpush.bf16.msra.mxu0 %v978
    %1334 = vmatpush.bf16.msra.mxu0 %v974
    %1335 = vmatpush.bf16.msra.mxu0 %v970
    %1336 = vmatmul.bf16.gmra.mxu0 %v108
    %v1337 = vpop.f32.mrf.mxu0
    %v1338 = vadd.f32 %v1325, %v1337
    %v1339 = vpop.f32.mrf.mxu0
    %1340 = vdwg.mxu0
    %1341 = vmatpush.bf16.msra.mxu0 %v1030
    %1342 = vmatpush.bf16.msra.mxu0 %v1026
    %1343 = vmatpush.bf16.msra.mxu0 %v1022
    %1344 = vmatpush.bf16.msra.mxu0 %v1018
    %1345 = vmatpush.bf16.msra.mxu0 %v1014
    %1346 = vmatpush.bf16.msra.mxu0 %v1010
    %1347 = vmatpush.bf16.msra.mxu0 %v1006
    %1348 = vmatpush.bf16.msra.mxu0 %v1002
    %1349 = vmatmul.bf16.gmra.mxu0 %v109
    %v1350 = vpop.f32.mrf.mxu0
    %v1351 = vadd.f32 %v1338, %v1350
    %v1352 = vpop.f32.mrf.mxu0
    %1353 = vdwg.mxu0
    %1354 = vmatpush.bf16.msra.mxu0 %v1062
    %1355 = vmatpush.bf16.msra.mxu0 %v1058
    %1356 = vmatpush.bf16.msra.mxu0 %v1054
    %1357 = vmatpush.bf16.msra.mxu0 %v1050
    %1358 = vmatpush.bf16.msra.mxu0 %v1046
    %1359 = vmatpush.bf16.msra.mxu0 %v1042
    %1360 = vmatpush.bf16.msra.mxu0 %v1038
    %1361 = vmatpush.bf16.msra.mxu0 %v1034
    %1362 = vmatmul.bf16.gmra.mxu0 %v110
    %v1363 = vpop.f32.mrf.mxu0
    %v1364 = vadd.f32 %v1351, %v1363
    %v1365 = vpop.f32.mrf.mxu0
    %1366 = vdwg.mxu0
    %1367 = vmatpush.bf16.msra.mxu0 %v1094
    %1368 = vmatpush.bf16.msra.mxu0 %v1090
    %1369 = vmatpush.bf16.msra.mxu0 %v1086
    %1370 = vmatpush.bf16.msra.mxu0 %v1082
    %1371 = vmatpush.bf16.msra.mxu0 %v1078
    %1372 = vmatpush.bf16.msra.mxu0 %v1074
    %1373 = vmatpush.bf16.msra.mxu0 %v1070
    %1374 = vmatpush.bf16.msra.mxu0 %v1066
    %1375 = vmatmul.bf16.gmra.mxu0 %v111
    %v1376 = vpop.f32.mrf.mxu0
    %v1377 = vadd.f32 %v1364, %v1376
    %v1378 = vpop.f32.mrf.mxu0
    %1379 = vdwg.mxu0
    %1380 = vmatpush.bf16.msra.mxu0 0
    %1381 = vmatpush.bf16.msra.mxu0 0
    %1382 = vmatpush.bf16.msra.mxu0 0
    %1383 = vmatpush.bf16.msra.mxu0 0
    %1384 = vmatpush.bf16.msra.mxu0 0
    %1385 = vmatpush.bf16.msra.mxu0 0
    %1386 = vmatpush.bf16.msra.mxu0 0
    %1387 = vmatpush.bf16.msra.mxu0 %v1098
    %1388 = vmatmul.bf16.gmra.mxu0 %v1300
    %v1389 = vpop.f32.mrf.mxu0
    %v1390 = vadd.f32 %v1377, %v1389
    %v1391 = vpop.f32.mrf.mxu0
    %1392 = vdwg.mxu0
    %1393 = vmatpush.bf16.msra.mxu0 %v935
    %1394 = vmatpush.bf16.msra.mxu0 %v931
    %1395 = vmatpush.bf16.msra.mxu0 %v927
    %1396 = vmatpush.bf16.msra.mxu0 %v923
    %1397 = vmatpush.bf16.msra.mxu0 %v919
    %1398 = vmatpush.bf16.msra.mxu0 %v915
    %1399 = vmatpush.bf16.msra.mxu0 %v911
    %1400 = vmatpush.bf16.msra.mxu0 %v907
    %1401 = vmatmul.bf16.gmra.mxu0 %v106
    %v1402 = vpop.f32.mrf.mxu0
    %v1403 = vadd.f32 %v311, %v1402
    %v1404 = vpop.f32.mrf.mxu0
    %1405 = vdwg.mxu0
    %1406 = vmatpush.bf16.msra.mxu0 %v967
    %1407 = vmatpush.bf16.msra.mxu0 %v963
    %1408 = vmatpush.bf16.msra.mxu0 %v959
    %1409 = vmatpush.bf16.msra.mxu0 %v955
    %1410 = vmatpush.bf16.msra.mxu0 %v951
    %1411 = vmatpush.bf16.msra.mxu0 %v947
    %1412 = vmatpush.bf16.msra.mxu0 %v943
    %1413 = vmatpush.bf16.msra.mxu0 %v939
    %1414 = vmatmul.bf16.gmra.mxu0 %v107
    %v1415 = vpop.f32.mrf.mxu0
    %v1416 = vadd.f32 %v1403, %v1415
    %v1417 = vpop.f32.mrf.mxu0
    %1418 = vdwg.mxu0
    %1419 = vmatpush.bf16.msra.mxu0 %v999
    %1420 = vmatpush.bf16.msra.mxu0 %v995
    %1421 = vmatpush.bf16.msra.mxu0 %v991
    %1422 = vmatpush.bf16.msra.mxu0 %v987
    %1423 = vmatpush.bf16.msra.mxu0 %v983
    %1424 = vmatpush.bf16.msra.mxu0 %v979
    %1425 = vmatpush.bf16.msra.mxu0 %v975
    %1426 = vmatpush.bf16.msra.mxu0 %v971
    %1427 = vmatmul.bf16.gmra.mxu0 %v108
    %v1428 = vpop.f32.mrf.mxu0
    %v1429 = vadd.f32 %v1416, %v1428
    %v1430 = vpop.f32.mrf.mxu0
    %1431 = vdwg.mxu0
    %1432 = vmatpush.bf16.msra.mxu0 %v1031
    %1433 = vmatpush.bf16.msra.mxu0 %v1027
    %1434 = vmatpush.bf16.msra.mxu0 %v1023
    %1435 = vmatpush.bf16.msra.mxu0 %v1019
    %1436 = vmatpush.bf16.msra.mxu0 %v1015
    %1437 = vmatpush.bf16.msra.mxu0 %v1011
    %1438 = vmatpush.bf16.msra.mxu0 %v1007
    %1439 = vmatpush.bf16.msra.mxu0 %v1003
    %1440 = vmatmul.bf16.gmra.mxu0 %v109
    %v1441 = vpop.f32.mrf.mxu0
    %v1442 = vadd.f32 %v1429, %v1441
    %v1443 = vpop.f32.mrf.mxu0
    %1444 = vdwg.mxu0
    %1445 = vmatpush.bf16.msra.mxu0 %v1063
    %1446 = vmatpush.bf16.msra.mxu0 %v1059
    %1447 = vmatpush.bf16.msra.mxu0 %v1055
    %1448 = vmatpush.bf16.msra.mxu0 %v1051
    %1449 = vmatpush.bf16.msra.mxu0 %v1047
    %1450 = vmatpush.bf16.msra.mxu0 %v1043
    %1451 = vmatpush.bf16.msra.mxu0 %v1039
    %1452 = vmatpush.bf16.msra.mxu0 %v1035
    %1453 = vmatmul.bf16.gmra.mxu0 %v110
    %v1454 = vpop.f32.mrf.mxu0
    %v1455 = vadd.f32 %v1442, %v1454
    %v1456 = vpop.f32.mrf.mxu0
    %1457 = vdwg.mxu0
    %1458 = vmatpush.bf16.msra.mxu0 %v1095
    %1459 = vmatpush.bf16.msra.mxu0 %v1091
    %1460 = vmatpush.bf16.msra.mxu0 %v1087
    %1461 = vmatpush.bf16.msra.mxu0 %v1083
    %1462 = vmatpush.bf16.msra.mxu0 %v1079
    %1463 = vmatpush.bf16.msra.mxu0 %v1075
    %1464 = vmatpush.bf16.msra.mxu0 %v1071
    %1465 = vmatpush.bf16.msra.mxu0 %v1067
    %1466 = vmatmul.bf16.gmra.mxu0 %v111
    %v1467 = vpop.f32.mrf.mxu0
    %v1468 = vadd.f32 %v1455, %v1467
    %v1469 = vpop.f32.mrf.mxu0
    %1470 = vdwg.mxu0
    %1471 = vmatpush.bf16.msra.mxu0 0
    %1472 = vmatpush.bf16.msra.mxu0 0
    %1473 = vmatpush.bf16.msra.mxu0 0
    %1474 = vmatpush.bf16.msra.mxu0 0
    %1475 = vmatpush.bf16.msra.mxu0 0
    %1476 = vmatpush.bf16.msra.mxu0 0
    %1477 = vmatpush.bf16.msra.mxu0 0
    %1478 = vmatpush.bf16.msra.mxu0 %v1099
    %1479 = vmatmul.bf16.gmra.mxu0 %v1300
    %v1480 = vpop.f32.mrf.mxu0
    %v1481 = vadd.f32 %v1468, %v1480
    %v1482 = vpop.f32.mrf.mxu0
    %1483 = vdwg.mxu0
    %1484 = vmatpush.bf16.msra.mxu0 %v936
    %1485 = vmatpush.bf16.msra.mxu0 %v932
    %1486 = vmatpush.bf16.msra.mxu0 %v928
    %1487 = vmatpush.bf16.msra.mxu0 %v924
    %1488 = vmatpush.bf16.msra.mxu0 %v920
    %1489 = vmatpush.bf16.msra.mxu0 %v916
    %1490 = vmatpush.bf16.msra.mxu0 %v912
    %1491 = vmatpush.bf16.msra.mxu0 %v908
    %1492 = vmatmul.bf16.gmra.mxu0 %v106
    %v1493 = vpop.f32.mrf.mxu0
    %v1494 = vadd.f32 %v312, %v1493
    %v1495 = vpop.f32.mrf.mxu0
    %1496 = vdwg.mxu0
    %1497 = vmatpush.bf16.msra.mxu0 %v968
    %1498 = vmatpush.bf16.msra.mxu0 %v964
    %1499 = vmatpush.bf16.msra.mxu0 %v960
    %1500 = vmatpush.bf16.msra.mxu0 %v956
    %1501 = vmatpush.bf16.msra.mxu0 %v952
    %1502 = vmatpush.bf16.msra.mxu0 %v948
    %1503 = vmatpush.bf16.msra.mxu0 %v944
    %1504 = vmatpush.bf16.msra.mxu0 %v940
    %1505 = vmatmul.bf16.gmra.mxu0 %v107
    %v1506 = vpop.f32.mrf.mxu0
    %v1507 = vadd.f32 %v1494, %v1506
    %v1508 = vpop.f32.mrf.mxu0
    %1509 = vdwg.mxu0
    %1510 = vmatpush.bf16.msra.mxu0 %v1000
    %1511 = vmatpush.bf16.msra.mxu0 %v996
    %1512 = vmatpush.bf16.msra.mxu0 %v992
    %1513 = vmatpush.bf16.msra.mxu0 %v988
    %1514 = vmatpush.bf16.msra.mxu0 %v984
    %1515 = vmatpush.bf16.msra.mxu0 %v980
    %1516 = vmatpush.bf16.msra.mxu0 %v976
    %1517 = vmatpush.bf16.msra.mxu0 %v972
    %1518 = vmatmul.bf16.gmra.mxu0 %v108
    %v1519 = vpop.f32.mrf.mxu0
    %v1520 = vadd.f32 %v1507, %v1519
    %v1521 = vpop.f32.mrf.mxu0
    %1522 = vdwg.mxu0
    %1523 = vmatpush.bf16.msra.mxu0 %v1032
    %1524 = vmatpush.bf16.msra.mxu0 %v1028
    %1525 = vmatpush.bf16.msra.mxu0 %v1024
    %1526 = vmatpush.bf16.msra.mxu0 %v1020
    %1527 = vmatpush.bf16.msra.mxu0 %v1016
    %1528 = vmatpush.bf16.msra.mxu0 %v1012
    %1529 = vmatpush.bf16.msra.mxu0 %v1008
    %1530 = vmatpush.bf16.msra.mxu0 %v1004
    %1531 = vmatmul.bf16.gmra.mxu0 %v109
    %v1532 = vpop.f32.mrf.mxu0
    %v1533 = vadd.f32 %v1520, %v1532
    %v1534 = vpop.f32.mrf.mxu0
    %1535 = vdwg.mxu0
    %1536 = vmatpush.bf16.msra.mxu0 %v1064
    %1537 = vmatpush.bf16.msra.mxu0 %v1060
    %1538 = vmatpush.bf16.msra.mxu0 %v1056
    %1539 = vmatpush.bf16.msra.mxu0 %v1052
    %1540 = vmatpush.bf16.msra.mxu0 %v1048
    %1541 = vmatpush.bf16.msra.mxu0 %v1044
    %1542 = vmatpush.bf16.msra.mxu0 %v1040
    %1543 = vmatpush.bf16.msra.mxu0 %v1036
    %1544 = vmatmul.bf16.gmra.mxu0 %v110
    %v1545 = vpop.f32.mrf.mxu0
    %v1546 = vadd.f32 %v1533, %v1545
    %v1547 = vpop.f32.mrf.mxu0
    %1548 = vdwg.mxu0
    %1549 = vmatpush.bf16.msra.mxu0 %v1096
    %1550 = vmatpush.bf16.msra.mxu0 %v1092
    %1551 = vmatpush.bf16.msra.mxu0 %v1088
    %1552 = vmatpush.bf16.msra.mxu0 %v1084
    %1553 = vmatpush.bf16.msra.mxu0 %v1080
    %1554 = vmatpush.bf16.msra.mxu0 %v1076
    %1555 = vmatpush.bf16.msra.mxu0 %v1072
    %1556 = vmatpush.bf16.msra.mxu0 %v1068
    %1557 = vmatmul.bf16.gmra.mxu0 %v111
    %v1558 = vpop.f32.mrf.mxu0
    %v1559 = vadd.f32 %v1546, %v1558
    %v1560 = vpop.f32.mrf.mxu0
    %1561 = vdwg.mxu0
    %1562 = vmatpush.bf16.msra.mxu0 0
    %1563 = vmatpush.bf16.msra.mxu0 0
    %1564 = vmatpush.bf16.msra.mxu0 0
    %1565 = vmatpush.bf16.msra.mxu0 0
    %1566 = vmatpush.bf16.msra.mxu0 0
    %1567 = vmatpush.bf16.msra.mxu0 0
    %1568 = vmatpush.bf16.msra.mxu0 0
    %1569 = vmatpush.bf16.msra.mxu0 %v1100
    %1570 = vmatmul.bf16.gmra.mxu0 %v1300
    %v1571 = vpop.f32.mrf.mxu0
    %v1572 = vadd.f32 %v1559, %v1571
    %v1573 = vpop.f32.mrf.mxu0
    %1574 = vdwg.mxu0
    %1575 = vmatpush.bf16.msra.mxu0 %v937
    %1576 = vmatpush.bf16.msra.mxu0 %v933
    %1577 = vmatpush.bf16.msra.mxu0 %v929
    %1578 = vmatpush.bf16.msra.mxu0 %v925
    %1579 = vmatpush.bf16.msra.mxu0 %v921
    %1580 = vmatpush.bf16.msra.mxu0 %v917
    %1581 = vmatpush.bf16.msra.mxu0 %v913
    %1582 = vmatpush.bf16.msra.mxu0 %v909
    %1583 = vmatmul.bf16.gmra.mxu0 %v106
    %v1584 = vpop.f32.mrf.mxu0
    %v1585 = vadd.f32 %v313, %v1584
    %v1586 = vpop.f32.mrf.mxu0
    %1587 = vdwg.mxu0
    %1588 = vmatpush.bf16.msra.mxu0 %v969
    %1589 = vmatpush.bf16.msra.mxu0 %v965
    %1590 = vmatpush.bf16.msra.mxu0 %v961
    %1591 = vmatpush.bf16.msra.mxu0 %v957
    %1592 = vmatpush.bf16.msra.mxu0 %v953
    %1593 = vmatpush.bf16.msra.mxu0 %v949
    %1594 = vmatpush.bf16.msra.mxu0 %v945
    %1595 = vmatpush.bf16.msra.mxu0 %v941
    %1596 = vmatmul.bf16.gmra.mxu0 %v107
    %v1597 = vpop.f32.mrf.mxu0
    %v1598 = vadd.f32 %v1585, %v1597
    %v1599 = vpop.f32.mrf.mxu0
    %1600 = vdwg.mxu0
    %1601 = vmatpush.bf16.msra.mxu0 %v1001
    %1602 = vmatpush.bf16.msra.mxu0 %v997
    %1603 = vmatpush.bf16.msra.mxu0 %v993
    %1604 = vmatpush.bf16.msra.mxu0 %v989
    %1605 = vmatpush.bf16.msra.mxu0 %v985
    %1606 = vmatpush.bf16.msra.mxu0 %v981
    %1607 = vmatpush.bf16.msra.mxu0 %v977
    %1608 = vmatpush.bf16.msra.mxu0 %v973
    %1609 = vmatmul.bf16.gmra.mxu0 %v108
    %v1610 = vpop.f32.mrf.mxu0
    %v1611 = vadd.f32 %v1598, %v1610
    %v1612 = vpop.f32.mrf.mxu0
    %1613 = vdwg.mxu0
    %1614 = vmatpush.bf16.msra.mxu0 %v1033
    %1615 = vmatpush.bf16.msra.mxu0 %v1029
    %1616 = vmatpush.bf16.msra.mxu0 %v1025
    %1617 = vmatpush.bf16.msra.mxu0 %v1021
    %1618 = vmatpush.bf16.msra.mxu0 %v1017
    %1619 = vmatpush.bf16.msra.mxu0 %v1013
    %1620 = vmatpush.bf16.msra.mxu0 %v1009
    %1621 = vmatpush.bf16.msra.mxu0 %v1005
    %1622 = vmatmul.bf16.gmra.mxu0 %v109
    %v1623 = vpop.f32.mrf.mxu0
    %v1624 = vadd.f32 %v1611, %v1623
    %v1625 = vpop.f32.mrf.mxu0
    %1626 = vdwg.mxu0
    %1627 = vmatpush.bf16.msra.mxu0 %v1065
    %1628 = vmatpush.bf16.msra.mxu0 %v1061
    %1629 = vmatpush.bf16.msra.mxu0 %v1057
    %1630 = vmatpush.bf16.msra.mxu0 %v1053
    %1631 = vmatpush.bf16.msra.mxu0 %v1049
    %1632 = vmatpush.bf16.msra.mxu0 %v1045
    %1633 = vmatpush.bf16.msra.mxu0 %v1041
    %1634 = vmatpush.bf16.msra.mxu0 %v1037
    %1635 = vmatmul.bf16.gmra.mxu0 %v110
    %v1636 = vpop.f32.mrf.mxu0
    %v1637 = vadd.f32 %v1624, %v1636
    %v1638 = vpop.f32.mrf.mxu0
    %1639 = vdwg.mxu0
    %1640 = vmatpush.bf16.msra.mxu0 %v1097
    %1641 = vmatpush.bf16.msra.mxu0 %v1093
    %1642 = vmatpush.bf16.msra.mxu0 %v1089
    %1643 = vmatpush.bf16.msra.mxu0 %v1085
    %1644 = vmatpush.bf16.msra.mxu0 %v1081
    %1645 = vmatpush.bf16.msra.mxu0 %v1077
    %1646 = vmatpush.bf16.msra.mxu0 %v1073
    %1647 = vmatpush.bf16.msra.mxu0 %v1069
    %1648 = vmatmul.bf16.gmra.mxu0 %v111
    %v1649 = vpop.f32.mrf.mxu0
    %v1650 = vadd.f32 %v1637, %v1649
    %v1651 = vpop.f32.mrf.mxu0
    %1652 = vdwg.mxu0
    %1653 = vmatpush.bf16.msra.mxu0 0
    %1654 = vmatpush.bf16.msra.mxu0 0
    %1655 = vmatpush.bf16.msra.mxu0 0
    %1656 = vmatpush.bf16.msra.mxu0 0
    %1657 = vmatpush.bf16.msra.mxu0 0
    %1658 = vmatpush.bf16.msra.mxu0 0
    %1659 = vmatpush.bf16.msra.mxu0 0
    %1660 = vmatpush.bf16.msra.mxu0 %v1101
    %1661 = vmatmul.bf16.gmra.mxu0 %v1300
    %v1662 = vpop.f32.mrf.mxu0
    %v1663 = vadd.f32 %v1650, %v1662
    %v1664 = vpop.f32.mrf.mxu0
    %1665 = vdwg.mxu0
    %v1666 = vmax.f32 %v1390, 0.0
    %v1667 = vmax.f32 %v1481, 0.0
    %v1668 = vmax.f32 %v1572, 0.0
    %v1669 = vmax.f32 %v1663, 0.0
    %v1670 = vpack.c.bf16 %v1666, %v1666
    %v1671 = vpack.c.bf16 %v1667, %v1667
    %v1672 = vpack.c.bf16 %v1668, %v1668
    %v1673 = vpack.c.bf16 %v1669, %v1669
    %v1674 = vld [vmem:[#allocation7] sm:$0xf]
    %v1675 = vld [vmem:[#allocation7 + $0x4] sm:$0xf]
    %v1676 = vld [vmem:[#allocation7 + $0x8] sm:$0xf]
    %v1677 = vld [vmem:[#allocation7 + $0xc] sm:$0xf]
    %v1678 = vld [vmem:[#allocation7 + $0x10] sm:$0xf]
    %v1679 = vld [vmem:[#allocation7 + $0x14] sm:$0xf]
    %v1680 = vld [vmem:[#allocation7 + $0x18] sm:$0xf]
    %v1681 = vld [vmem:[#allocation7 + $0x1c] sm:$0xf]
    %v1682 = vld [vmem:[#allocation7 + $0x20] sm:$0xf]
    %v1683 = vld [vmem:[#allocation7 + $0x24] sm:$0xf]
    %v1684 = vld [vmem:[#allocation7 + $0x28] sm:$0xf]
    %v1685 = vld [vmem:[#allocation7 + $0x2c] sm:$0xf]
    %v1686 = vld [vmem:[#allocation7 + $0x30] sm:$0xf]
    %v1687 = vld [vmem:[#allocation7 + $0x34] sm:$0xf]
    %v1688 = vld [vmem:[#allocation7 + $0x38] sm:$0xf]
    %v1689 = vld [vmem:[#allocation7 + $0x3c] sm:$0xf]
    %v1690 = vld [vmem:[#allocation7 + $0x40] sm:$0xf]
    %v1691 = vld [vmem:[#allocation7 + $0x44] sm:$0xf]
    %v1692 = vld [vmem:[#allocation7 + $0x48] sm:$0xf]
    %v1693 = vld [vmem:[#allocation7 + $0x4c] sm:$0xf]
    %v1694 = vld [vmem:[#allocation7 + $0x50] sm:$0xf]
    %v1695 = vld [vmem:[#allocation7 + $0x54] sm:$0xf]
    %v1696 = vld [vmem:[#allocation7 + $0x58] sm:$0xf]
    %v1697 = vld [vmem:[#allocation7 + $0x5c] sm:$0xf]
    %v1698 = vld [vmem:[#allocation7 + $0x60] sm:$0xf]
    %v1699 = vld [vmem:[#allocation7 + $0x64] sm:$0xf]
    %v1700 = vld [vmem:[#allocation7 + $0x68] sm:$0xf]
    %v1701 = vld [vmem:[#allocation7 + $0x6c] sm:$0xf]
    %v1702 = vld [vmem:[#allocation7 + $0x70] sm:$0xf]
    %v1703 = vld [vmem:[#allocation7 + $0x74] sm:$0xf]
    %v1704 = vld [vmem:[#allocation7 + $0x78] sm:$0xf]
    %v1705 = vld [vmem:[#allocation7 + $0x7c] sm:$0xf]
    %v1706 = vld [vmem:[#allocation7 + $0x80] sm:$0xf]
    %v1707 = vld [vmem:[#allocation7 + $0x84] sm:$0xf]
    %v1708 = vld [vmem:[#allocation7 + $0x88] sm:$0xf]
    %v1709 = vld [vmem:[#allocation7 + $0x8c] sm:$0xf]
    %v1710 = vld [vmem:[#allocation7 + $0x90] sm:$0xf]
    %v1711 = vld [vmem:[#allocation7 + $0x94] sm:$0xf]
    %v1712 = vld [vmem:[#allocation7 + $0x98] sm:$0xf]
    %v1713 = vld [vmem:[#allocation7 + $0x9c] sm:$0xf]
    %v1714 = vld [vmem:[#allocation7 + $0xa0] sm:$0xf]
    %v1715 = vld [vmem:[#allocation7 + $0xa4] sm:$0xf]
    %v1716 = vld [vmem:[#allocation7 + $0xa8] sm:$0xf]
    %v1717 = vld [vmem:[#allocation7 + $0xac] sm:$0xf]
    %v1718 = vld [vmem:[#allocation7 + $0xb0] sm:$0xf]
    %v1719 = vld [vmem:[#allocation7 + $0xb4] sm:$0xf]
    %v1720 = vld [vmem:[#allocation7 + $0xb8] sm:$0xf]
    %v1721 = vld [vmem:[#allocation7 + $0xbc] sm:$0xf]
    %v1722 = vld [vmem:[#allocation7 + $0xc0] sm:$0xf]
    %v1723 = vld [vmem:[#allocation7 + $0xc4] sm:$0xf]
    %v1724 = vld [vmem:[#allocation7 + $0xc8] sm:$0xf]
    %v1725 = vld [vmem:[#allocation7 + $0xcc] sm:$0xf]
    %v1726 = vld [vmem:[#allocation7 + $0xd0] sm:$0xf]
    %v1727 = vld [vmem:[#allocation7 + $0xd4] sm:$0xf]
    %v1728 = vld [vmem:[#allocation7 + $0xd8] sm:$0xf]
    %v1729 = vld [vmem:[#allocation7 + $0xdc] sm:$0xf]
    %v1730 = vld [vmem:[#allocation7 + $0xe0] sm:$0xf]
    %v1731 = vld [vmem:[#allocation7 + $0xe4] sm:$0xf]
    %v1732 = vld [vmem:[#allocation7 + $0xe8] sm:$0xf]
    %v1733 = vld [vmem:[#allocation7 + $0xec] sm:$0xf]
    %v1734 = vld [vmem:[#allocation7 + $0xf0] sm:$0xf]
    %v1735 = vld [vmem:[#allocation7 + $0xf4] sm:$0xf]
    %v1736 = vld [vmem:[#allocation7 + $0xf8] sm:$0xf]
    %v1737 = vld [vmem:[#allocation7 + $0xfc] sm:$0xf]
    %v1739 = vperm.slane %v104, 0
    %v1805 = vunpack.c.l.b16 %v1674
    %v1806 = vunpack.c.l.b16 %v1675
    %v1807 = vunpack.c.l.b16 %v1676
    %v1808 = vunpack.c.l.b16 %v1677
    %v1809 = vunpack.c.l.b16 %v1678
    %v1810 = vunpack.c.l.b16 %v1679
    %v1811 = vunpack.c.l.b16 %v1680
    %v1812 = vunpack.c.l.b16 %v1681
    %v1813 = vunpack.c.l.b16 %v1682
    %v1814 = vunpack.c.l.b16 %v1683
    %v1815 = vunpack.c.l.b16 %v1684
    %v1816 = vunpack.c.l.b16 %v1685
    %v1817 = vunpack.c.l.b16 %v1686
    %v1818 = vunpack.c.l.b16 %v1687
    %v1819 = vunpack.c.l.b16 %v1688
    %v1820 = vunpack.c.l.b16 %v1689
    %v1821 = vunpack.c.l.b16 %v1690
    %v1822 = vunpack.c.l.b16 %v1691
    %v1823 = vunpack.c.l.b16 %v1692
    %v1824 = vunpack.c.l.b16 %v1693
    %v1825 = vunpack.c.l.b16 %v1694
    %v1826 = vunpack.c.l.b16 %v1695
    %v1827 = vunpack.c.l.b16 %v1696
    %v1828 = vunpack.c.l.b16 %v1697
    %v1829 = vunpack.c.l.b16 %v1698
    %v1830 = vunpack.c.l.b16 %v1699
    %v1831 = vunpack.c.l.b16 %v1700
    %v1832 = vunpack.c.l.b16 %v1701
    %v1833 = vunpack.c.l.b16 %v1702
    %v1834 = vunpack.c.l.b16 %v1703
    %v1835 = vunpack.c.l.b16 %v1704
    %v1836 = vunpack.c.l.b16 %v1705
    %v1837 = vunpack.c.l.b16 %v1706
    %v1838 = vunpack.c.l.b16 %v1707
    %v1839 = vunpack.c.l.b16 %v1708
    %v1840 = vunpack.c.l.b16 %v1709
    %v1841 = vunpack.c.l.b16 %v1710
    %v1842 = vunpack.c.l.b16 %v1711
    %v1843 = vunpack.c.l.b16 %v1712
    %v1844 = vunpack.c.l.b16 %v1713
    %v1845 = vunpack.c.l.b16 %v1714
    %v1846 = vunpack.c.l.b16 %v1715
    %v1847 = vunpack.c.l.b16 %v1716
    %v1848 = vunpack.c.l.b16 %v1717
    %v1849 = vunpack.c.l.b16 %v1718
    %v1850 = vunpack.c.l.b16 %v1719
    %v1851 = vunpack.c.l.b16 %v1720
    %v1852 = vunpack.c.l.b16 %v1721
    %v1853 = vunpack.c.l.b16 %v1722
    %v1854 = vunpack.c.l.b16 %v1723
    %v1855 = vunpack.c.l.b16 %v1724
    %v1856 = vunpack.c.l.b16 %v1725
    %v1857 = vunpack.c.l.b16 %v1726
    %v1858 = vunpack.c.l.b16 %v1727
    %v1859 = vunpack.c.l.b16 %v1728
    %v1860 = vunpack.c.l.b16 %v1729
    %v1861 = vunpack.c.l.b16 %v1730
    %v1862 = vunpack.c.l.b16 %v1731
    %v1863 = vunpack.c.l.b16 %v1732
    %v1864 = vunpack.c.l.b16 %v1733
    %v1865 = vunpack.c.l.b16 %v1734
    %v1866 = vunpack.c.l.b16 %v1735
    %v1867 = vunpack.c.l.b16 %v1736
    %v1868 = vunpack.c.l.b16 %v1737
    %v1869 = vpack.c.b16 %v1806, %v1805
    %v1870 = vpack.c.b16 %v1808, %v1807
    %v1871 = vpack.c.b16 %v1810, %v1809
    %v1872 = vpack.c.b16 %v1812, %v1811
    %v1873 = vpack.c.b16 %v1814, %v1813
    %v1874 = vpack.c.b16 %v1816, %v1815
    %v1875 = vpack.c.b16 %v1818, %v1817
    %v1876 = vpack.c.b16 %v1820, %v1819
    %v1877 = vpack.c.b16 %v1822, %v1821
    %v1878 = vpack.c.b16 %v1824, %v1823
    %v1879 = vpack.c.b16 %v1826, %v1825
    %v1880 = vpack.c.b16 %v1828, %v1827
    %v1881 = vpack.c.b16 %v1830, %v1829
    %v1882 = vpack.c.b16 %v1832, %v1831
    %v1883 = vpack.c.b16 %v1834, %v1833
    %v1884 = vpack.c.b16 %v1836, %v1835
    %v1885 = vpack.c.b16 %v1838, %v1837
    %v1886 = vpack.c.b16 %v1840, %v1839
    %v1887 = vpack.c.b16 %v1842, %v1841
    %v1888 = vpack.c.b16 %v1844, %v1843
    %v1889 = vpack.c.b16 %v1846, %v1845
    %v1890 = vpack.c.b16 %v1848, %v1847
    %v1891 = vpack.c.b16 %v1850, %v1849
    %v1892 = vpack.c.b16 %v1852, %v1851
    %v1893 = vpack.c.b16 %v1854, %v1853
    %v1894 = vpack.c.b16 %v1856, %v1855
    %v1895 = vpack.c.b16 %v1858, %v1857
    %v1896 = vpack.c.b16 %v1860, %v1859
    %v1897 = vpack.c.b16 %v1862, %v1861
    %v1898 = vpack.c.b16 %v1864, %v1863
    %v1899 = vpack.c.b16 %v1866, %v1865
    %v1900 = vpack.c.b16 %v1868, %v1867
    %1933 = vmatpush.bf16.msra.mxu0 %v1876
    %1934 = vmatpush.bf16.msra.mxu0 %v1875
    %1935 = vmatpush.bf16.msra.mxu0 %v1874
    %1936 = vmatpush.bf16.msra.mxu0 %v1873
    %1937 = vmatpush.bf16.msra.mxu0 %v1872
    %1938 = vmatpush.bf16.msra.mxu0 %v1871
    %1939 = vmatpush.bf16.msra.mxu0 %v1870
    %1940 = vmatpush.bf16.msra.mxu0 %v1869
    %1941 = vmatmul.bf16.gmra.mxu0 %v1670
    %v1942 = vpop.f32.mrf.mxu0
    %v1943 = vadd.f32 %v1739, %v1942
    %v1944 = vpop.f32.mrf.mxu0
    %1945 = vdwg.mxu0
    %1946 = vmatpush.bf16.msra.mxu0 %v1884
    %1947 = vmatpush.bf16.msra.mxu0 %v1883
    %1948 = vmatpush.bf16.msra.mxu0 %v1882
    %1949 = vmatpush.bf16.msra.mxu0 %v1881
    %1950 = vmatpush.bf16.msra.mxu0 %v1880
    %1951 = vmatpush.bf16.msra.mxu0 %v1879
    %1952 = vmatpush.bf16.msra.mxu0 %v1878
    %1953 = vmatpush.bf16.msra.mxu0 %v1877
    %1954 = vmatmul.bf16.gmra.mxu0 %v1671
    %v1955 = vpop.f32.mrf.mxu0
    %v1956 = vadd.f32 %v1943, %v1955
    %v1957 = vpop.f32.mrf.mxu0
    %1958 = vdwg.mxu0
    %1959 = vmatpush.bf16.msra.mxu0 %v1892
    %1960 = vmatpush.bf16.msra.mxu0 %v1891
    %1961 = vmatpush.bf16.msra.mxu0 %v1890
    %1962 = vmatpush.bf16.msra.mxu0 %v1889
    %1963 = vmatpush.bf16.msra.mxu0 %v1888
    %1964 = vmatpush.bf16.msra.mxu0 %v1887
    %1965 = vmatpush.bf16.msra.mxu0 %v1886
    %1966 = vmatpush.bf16.msra.mxu0 %v1885
    %1967 = vmatmul.bf16.gmra.mxu0 %v1672
    %v1968 = vpop.f32.mrf.mxu0
    %v1969 = vadd.f32 %v1956, %v1968
    %v1970 = vpop.f32.mrf.mxu0
    %1971 = vdwg.mxu0
    %1972 = vmatpush.bf16.msra.mxu0 %v1900
    %1973 = vmatpush.bf16.msra.mxu0 %v1899
    %1974 = vmatpush.bf16.msra.mxu0 %v1898
    %1975 = vmatpush.bf16.msra.mxu0 %v1897
    %1976 = vmatpush.bf16.msra.mxu0 %v1896
    %1977 = vmatpush.bf16.msra.mxu0 %v1895
    %1978 = vmatpush.bf16.msra.mxu0 %v1894
    %1979 = vmatpush.bf16.msra.mxu0 %v1893
    %1980 = vmatmul.bf16.gmra.mxu0 %v1673
    %v1981 = vpop.f32.mrf.mxu0
    %v1982 = vadd.f32 %v1969, %v1981
    %v1983 = vpop.f32.mrf.mxu0
    %1984 = vdwg.mxu0
    %v1985 = vmax.f32 %v1982, 0.0
    %v1986 = vpack.c.bf16 %v1985, %v1985
    %v1987 = vld [vmem:[#allocation8] sm:$0xf]
    %v1988 = vld [vmem:[#allocation8 + $0x4] sm:$0xf]
    %v1989 = vld [vmem:[#allocation8 + $0x8] sm:$0xf]
    %v1990 = vld [vmem:[#allocation8 + $0xc] sm:$0xf]
    %v1991 = vld [vmem:[#allocation8 + $0x10] sm:$0xf]
    %v1992 = vld [vmem:[#allocation8 + $0x14] sm:$0xf]
    %v1993 = vld [vmem:[#allocation8 + $0x18] sm:$0xf]
    %v1994 = vld [vmem:[#allocation8 + $0x1c] sm:$0xf]
    %v1995 = vld [vmem:[#allocation8 + $0x20] sm:$0xf]
    %v1996 = vld [vmem:[#allocation8 + $0x24] sm:$0xf]
    %v1997 = vld [vmem:[#allocation8 + $0x28] sm:$0xf]
    %v1998 = vld [vmem:[#allocation8 + $0x2c] sm:$0xf]
    %v1999 = vld [vmem:[#allocation8 + $0x30] sm:$0xf]
    %v2000 = vld [vmem:[#allocation8 + $0x34] sm:$0xf]
    %v2001 = vld [vmem:[#allocation8 + $0x38] sm:$0xf]
    %v2002 = vld [vmem:[#allocation8 + $0x3c] sm:$0xf]
    %v2004 = vperm.slane %v105, 0
    %v2022 = vunpack.c.l.b16 %v1987
    %v2023 = vunpack.c.l.b16 %v1988
    %v2024 = vunpack.c.l.b16 %v1989
    %v2025 = vunpack.c.l.b16 %v1990
    %v2026 = vunpack.c.l.b16 %v1991
    %v2027 = vunpack.c.l.b16 %v1992
    %v2028 = vunpack.c.l.b16 %v1993
    %v2029 = vunpack.c.l.b16 %v1994
    %v2030 = vunpack.c.l.b16 %v1995
    %v2031 = vunpack.c.l.b16 %v1996
    %v2032 = vunpack.c.l.b16 %v1997
    %v2033 = vunpack.c.l.b16 %v1998
    %v2034 = vunpack.c.l.b16 %v1999
    %v2035 = vunpack.c.l.b16 %v2000
    %v2036 = vunpack.c.l.b16 %v2001
    %v2037 = vunpack.c.l.b16 %v2002
    %v2038 = vpack.c.b16 %v2023, %v2022
    %v2039 = vpack.c.b16 %v2025, %v2024
    %v2040 = vpack.c.b16 %v2027, %v2026
    %v2041 = vpack.c.b16 %v2029, %v2028
    %v2042 = vpack.c.b16 %v2031, %v2030
    %v2043 = vpack.c.b16 %v2033, %v2032
    %v2044 = vpack.c.b16 %v2035, %v2034
    %v2045 = vpack.c.b16 %v2037, %v2036
    %2054 = vmatpush.bf16.msra.mxu0 %v2045
    %2055 = vmatpush.bf16.msra.mxu0 %v2044
    %2056 = vmatpush.bf16.msra.mxu0 %v2043
    %2057 = vmatpush.bf16.msra.mxu0 %v2042
    %2058 = vmatpush.bf16.msra.mxu0 %v2041
    %2059 = vmatpush.bf16.msra.mxu0 %v2040
    %2060 = vmatpush.bf16.msra.mxu0 %v2039
    %2061 = vmatpush.bf16.msra.mxu0 %v2038
    %2062 = vmatmul.bf16.gmra.mxu0 %v1986
    %v2063 = vpop.f32.mrf.mxu0
    %v2064 = vadd.f32 %v2004, %v2063
    %v2065 = vpop.f32.mrf.mxu0
    %2066 = vdwg.mxu0
    %v2067 = vlaneseq
    %v2068 = vand.u32 %v2067, 127
    %vm2069 = vcmp.lt.s32.totalorder %v2068, 10
    %v2070 = vsel %vm2069, %v2064, -1e+30
    %2071 = vmax.xlane.f32.xlu0 %v2070
    %v2072 = vpop.xlane.xlu0 %2071
    %v2073 = vsub.f32 %v2070, %v2072
    %v2074 = vmul.f32 %v2073, 1.442695
    %v2075 = vpow.pop %v2074
    %2076 = vadd.xlane.f32.xlu0 %v2075
    %v2077 = vpop.xlane.xlu0 %2076
    %v2078 = vrcp.pop %v2077
    %v2079 = vmul.f32 %v2075, %v2078
    %2080 = vst [vmem:[#allocation11] sm:$0xff] %v2079
    // Predicated region
    $region42: #{tpu_custom_call.1} parent=1 // pred_check
      _
    $region43: #{tpu_custom_call.1} parent=1 // pred_check_branch
      %2082 = sbr.rel (0) target = $region45
    $region44: #{tpu_custom_call.1} parent=1 // pred_region
      %2084 = vsyncadd [#allocation4], 0
      %s2086 = sshll.u32 [#allocation11], 4
      %s2087 = int_to_ptr.vmem [resolvable:$true] %s2086
      %s2088 = sshll.u32 %s5, 4
      %s2089 = int_to_ptr.hbm [resolvable:$true] %s2088
      %2091 = dma.vmem_to_hbm [thread:$0]  %s2087, 128, %s2089, [#allocation4]
    $region45: #{tpu_custom_call.1} parent=1 // pred_fallthru
      _
    // Predicated region
    $region46: #{tpu_custom_call.1} parent=1 // pred_check
      _
    $region47: #{tpu_custom_call.1} parent=1 // pred_check_branch
      %2093 = sbr.rel (0) target = $region49
    $region48: #{tpu_custom_call.1} parent=1 // pred_region
      %2095 = dma.done [#allocation4], 128
    $region49: #{tpu_custom_call.1} parent=1 // pred_fallthru
      _
    %2096 = vsyncpa [#allocation3], 1
    %2097 = vsyncpa [#allocation6], 1
    %2098 = vsyncpa [#allocation9], 1
    %2099 = vsyncpa [#allocation4], 1

</llo_original>
